<compile_context>
chip_gen: v7x
topology: tpu7x:2x2x1
jax: 0.10.0
libtpu: 0.0.40
codegen_flags: <defaults>
</compile_context>

<pallas_src>
import jax
import jax.numpy as jnp
from jax.experimental import pallas as pl
from jax.experimental.pallas import tpu as pltpu

# Module-consistent sizes.
SEQ_LEN = 5            # len(sentences); lstm_out.view(T, -1) only works for T == 5
BATCH = 5              # hard-coded "5" in sentences.view(len(sentences), 5, -1)
INPUT_DIM = 8
HIDDEN_DIM = 32
TAGSET_SIZE = 16

# Kernel tiling.
PAD_TAGS = 128                         # lane-dense padded tag dimension
NB_SENT = 64                           # sentences per grid block
ROWS_PER_BLOCK = NB_SENT * BATCH       # 320 recurrence rows / block (multiple of 8)
ROW_CHUNK = 64                         # rows per inner recurrence chunk (vreg budget)
NUM_CHUNKS = ROWS_PER_BLOCK // ROW_CHUNK   # 5
NEG_INF = -1e30


def lstm_tagger_kernel(gates_ref, whh_ref, wtag_ref, btag_ref, out_ref):
    """One block of NB_SENT sentences per grid step.

    gates_ref: (T, R, 4H)  f32  precomputed x @ W_ih^T + b, time-major,
                                R = NB_SENT * BATCH rows, gate order (i, f, o, g)
    whh_ref:   (H, 4H)     f32  W_hh transposed
    wtag_ref:  (H, 128)    f32  hidden2tag weight, zero-padded 16 -> 128 columns
    btag_ref:  (1, 128)    f32  bias; pad columns = -1e30 (ignored by log-softmax)
    out_ref:   (R, 128)    f32  log-probs (valid in [:, :TAGSET_SIZE])
    """
    H = HIDDEN_DIM
    T = SEQ_LEN
    whh = whh_ref[...]                 # (32, 128), VMEM/vreg resident
    wtag = wtag_ref[...]               # (32, 128)
    btag = btag_ref[...]               # (1, 128)

    def chunk_body(ci, carry):
        # 64-row chunk: bounds vreg pressure; rows are independent LSTM lanes.
        r0 = pl.multiple_of(ci * ROW_CHUNK, ROW_CHUNK)
        h = jnp.zeros((ROW_CHUNK, H), jnp.float32)
        c = jnp.zeros((ROW_CHUNK, H), jnp.float32)
        for t in range(T):             # fully unrolled 5-step recurrence
            g = gates_ref[t, pl.ds(r0, ROW_CHUNK), :] + jnp.dot(
                h, whh, preferred_element_type=jnp.float32)      # (64, 128)
            sig = jax.nn.sigmoid(g[:, :3 * H])    # i, f, o gates in one pass
            g_c = jnp.tanh(g[:, 3 * H:])          # cell candidate only
            i_g = sig[:, :H]
            f_g = sig[:, H:2 * H]
            o_g = sig[:, 2 * H:3 * H]
            c = f_g * c + i_g * g_c
            h = o_g * jnp.tanh(c)
        # hidden2tag (lane-dense, padded) + stable log-softmax.
        logits = jnp.dot(h, wtag, preferred_element_type=jnp.float32) + btag
        m = jnp.max(logits, axis=1, keepdims=True)
        shifted = logits - m
        lse = jnp.log(jnp.sum(jnp.exp(shifted), axis=1, keepdims=True))
        out_ref[pl.ds(r0, ROW_CHUNK), :] = shifted - lse
        return carry

    jax.lax.fori_loop(0, NUM_CHUNKS, chunk_body, 0)


def init_params(key, input_dim, hidden_dim, tagset_size):
    """PyTorch-style uniform(-1/sqrt(H), 1/sqrt(H)) init, stored KERNEL-READY:
    weights pre-transposed, LSTM biases pre-folded, gate blocks permuted from
    PyTorch's (i, f, g, o) to kernel order (i, f, o, g), hidden2tag padded to
    128 lanes with -1e30 pad bias."""
    ks = jax.random.split(key, 6)
    H = hidden_dim
    bound = 1.0 / jnp.sqrt(jnp.float32(hidden_dim))
    u = lambda k, shape: jax.random.uniform(k, shape, jnp.float32, -bound, bound)
    # PyTorch layout: rows of weight_ih/hh are [i; f; g; o] blocks of size H.
    w_ih = u(ks[0], (4 * H, input_dim))
    w_hh = u(ks[1], (4 * H, H))
    b_ih = u(ks[2], (4 * H,))
    b_hh = u(ks[3], (4 * H,))
    w_tag = u(ks[4], (tagset_size, H))
    b_tag = u(ks[5], (tagset_size,))
    # (i, f, g, o) -> (i, f, o, g): sigmoid on one contiguous [:, :3H] slab.
    perm = jnp.concatenate([jnp.arange(0, 2 * H),
                            jnp.arange(3 * H, 4 * H),
                            jnp.arange(2 * H, 3 * H)])
    w_ih = w_ih[perm]
    w_hh = w_hh[perm]
    b = (b_ih + b_hh)[perm]
    # Lane-dense padded hidden2tag: pad columns get weight 0 and bias -1e30.
    w_tag_pad = jnp.zeros((H, PAD_TAGS), jnp.float32).at[:, :tagset_size].set(w_tag.T)
    b_tag_pad = jnp.full((1, PAD_TAGS), NEG_INF, jnp.float32).at[0, :tagset_size].set(b_tag)
    return {
        "w_ih_t": jnp.asarray(w_ih.T),           # (D, 4H), gate order (i, f, o, g)
        "w_hh_t": jnp.asarray(w_hh.T),           # (H, 4H)
        "b": b.reshape(1, -1),                   # (1, 4H)
        "w_tag_pad": w_tag_pad,                  # (H, 128)
        "b_tag_pad": b_tag_pad,                  # (1, 128)
        "w_tag_t": jnp.asarray(w_tag.T),         # (H, 16)  (reference / single path)
        "b_tag": b_tag.reshape(1, -1),           # (1, 16)
    }


def _forward_ref(sentences, params):
    """Pure-JAX path (mirrors the PyTorch module). Also used for N=1 calls,
    where pallas_call launch overhead exceeds the entire workload."""
    T = sentences.shape[0]
    assert T == SEQ_LEN == BATCH, \
        "lstm_out.view(len(sentences), -1) only well-formed when T == 5"
    x = sentences.reshape(T, BATCH, INPUT_DIM).astype(jnp.float32)
    H = HIDDEN_DIM
    hp = jax.lax.Precision.HIGHEST
    h = jnp.zeros((BATCH, H), jnp.float32)
    c = jnp.zeros((BATCH, H), jnp.float32)
    for t in range(T):
        g = (jnp.dot(x[t], params["w_ih_t"], precision=hp)
             + jnp.dot(h, params["w_hh_t"], precision=hp) + params["b"])
        i_g = jax.nn.sigmoid(g[:, :H])
        f_g = jax.nn.sigmoid(g[:, H:2 * H])
        o_g = jax.nn.sigmoid(g[:, 2 * H:3 * H])
        g_c = jnp.tanh(g[:, 3 * H:])
        c = f_g * c + i_g * g_c
        h = o_g * jnp.tanh(c)
    logits = jnp.dot(h, params["w_tag_t"], precision=hp) + params["b_tag"]
    return jax.nn.log_softmax(logits, axis=1)


def _forward_pallas_batch(sent_batch, params):
    """Batched Pallas path: (N, T, 5*D) -> (N, T, TAGSET_SIZE)."""
    N, T = sent_batch.shape[0], sent_batch.shape[1]
    assert T == SEQ_LEN == BATCH and sent_batch.shape[2] == BATCH * INPUT_DIM

    n_blocks = pl.cdiv(N, NB_SENT)
    if n_blocks > 1 and n_blocks % 2:
        n_blocks += 1                      # even grid -> both v7x TCs stay busy
    n_pad = n_blocks * NB_SENT

    x = sent_batch.reshape(N, T, BATCH, INPUT_DIM).astype(jnp.float32)
    x = jnp.pad(x, ((0, n_pad - N), (0, 0), (0, 0), (0, 0)))
    # Block-major, time-major row layout: (n_blocks, T, R, D), row = s*B + b.
    x = x.reshape(n_blocks, NB_SENT, T, BATCH, INPUT_DIM)
    x = x.transpose(0, 2, 1, 3, 4).reshape(n_blocks, T, ROWS_PER_BLOCK, INPUT_DIM)
    # Hoisted input projection: one XLA matmul; kernel input is 128-lane dense.
    gates_x = jnp.einsum("btrd,dg->btrg", x, params["w_ih_t"],
                         precision=jax.lax.Precision.HIGHEST) + params["b"]
    gates_x = gates_x.astype(jnp.float32)

    out = pl.pallas_call(
        lstm_tagger_kernel,
        out_shape=jax.ShapeDtypeStruct((n_blocks, ROWS_PER_BLOCK, PAD_TAGS),
                                       jnp.float32),
        grid=(n_blocks,),
        in_specs=[
            pl.BlockSpec((None, SEQ_LEN, ROWS_PER_BLOCK, 4 * HIDDEN_DIM),
                         lambda n: (n, 0, 0, 0)),
            pl.BlockSpec((HIDDEN_DIM, 4 * HIDDEN_DIM), lambda n: (0, 0)),
            pl.BlockSpec((HIDDEN_DIM, PAD_TAGS), lambda n: (0, 0)),
            pl.BlockSpec((1, PAD_TAGS), lambda n: (0, 0)),
        ],
        out_specs=pl.BlockSpec((None, ROWS_PER_BLOCK, PAD_TAGS),
                               lambda n: (n, 0, 0)),
        compiler_params=pltpu.CompilerParams(
            dimension_semantics=("parallel",),
            # Per-block live VMEM is ~2 MB (gates 0.8 MB x2 buffers + out);
            # the explicit limit keeps headroom obvious on v7x's 64 MiB VMEM.
            vmem_limit_bytes=32 * 1024 * 1024),
    )(gates_x, params["w_hh_t"], params["w_tag_pad"], params["b_tag_pad"])

    out = out.reshape(n_blocks, NB_SENT, BATCH, PAD_TAGS)
    out = out.reshape(n_pad, BATCH, PAD_TAGS)
    return out[:N, :, :TAGSET_SIZE]


def lstm_tagger_forward(sentences, params):
    """Forward pass. `sentences` is either a single (T, 5*D) tensor (module
    semantics; fused XLA path) or a stacked batch (N, T, 5*D) (Pallas path)."""
    if sentences.ndim == 2:
        return _forward_ref(sentences, params)
    return _forward_pallas_batch(sentences, params)


if __name__ == "__main__":
    key = jax.random.PRNGKey(0)
    k_param, k_batch = jax.random.split(key)
    params = init_params(k_param, INPUT_DIM, HIDDEN_DIM, TAGSET_SIZE)

    # Batched Pallas path: N deliberately not a multiple of the block size
    # (exercises padding); pads to 2 blocks -> even grid for v7x megacore.
    N = 120
    batch = jax.random.normal(k_batch, (N, SEQ_LEN, BATCH * INPUT_DIM), jnp.float32)
    out_b = jax.block_until_ready(lstm_tagger_forward(batch, params))
    assert out_b.shape == (N, SEQ_LEN, TAGSET_SIZE)

    # Spot-check several sentences against the pure-JAX reference.
    for i in (0, 1, 57, N - 1):
        ref_i = _forward_ref(batch[i], params)
        assert jnp.allclose(out_b[i], ref_i, rtol=1e-3, atol=1e-3), \
            f"batched mismatch at sentence {i}"

    # Single-sentence module semantics: (T, 5*D) -> (T, tagset_size).
    out_s = jax.block_until_ready(lstm_tagger_forward(batch[0], params))
    assert out_s.shape == (SEQ_LEN, TAGSET_SIZE)
    assert jnp.allclose(out_s, out_b[0], rtol=1e-3, atol=1e-3), "single-path mismatch"

    # TODO(synk): quantum-MGU branch (n_qubits > 0) has no Pallas equivalent; only
    # the classical nn.LSTM path is implemented. nn.Dropout is unused in forward.
    print("KERNEL_OK")
</pallas_src>

<mosaic_0001>
module attributes {stable_mosaic.version = 11 : i64} {
  func.func @lstm_tagger_kernel(%arg0: i32, %arg1: memref<1x5x320x128xf32, #tpu.memory_space<vmem>>, %arg2: memref<32x128xf32, #tpu.memory_space<vmem>>, %arg3: memref<32x128xf32, #tpu.memory_space<vmem>>, %arg4: memref<1x128xf32, #tpu.memory_space<vmem>>, %arg5: memref<1x320x128xf32, #tpu.memory_space<vmem>>) attributes {dimension_semantics = [#tpu.dimension_semantics<parallel>], iteration_bounds = array<i64: 2>, scalar_prefetch = 0 : i64, scratch_operands = 0 : i64, tpu.core_type = #tpu.core_type<tc>, window_params = [{transform_indices = @transform_0, window_bounds = array<i64: 1, 5, 320, 128>}, {pipeline_mode = #tpu.pipeline_mode<synchronous>, transform_indices = @transform_1, window_bounds = array<i64: 32, 128>}, {pipeline_mode = #tpu.pipeline_mode<synchronous>, transform_indices = @transform_2, window_bounds = array<i64: 32, 128>}, {pipeline_mode = #tpu.pipeline_mode<synchronous>, transform_indices = @transform_3, window_bounds = array<i64: 1, 128>}, {transform_indices = @transform_4, window_bounds = array<i64: 1, 320, 128>}]} {
    %c0 = arith.constant 0 : index
    %c0_0 = arith.constant 0 : index
    %0 = vector.load %arg2[%c0, %c0_0] : memref<32x128xf32, #tpu.memory_space<vmem>>, vector<32x128xf32>
    %c0_1 = arith.constant 0 : index
    %c0_2 = arith.constant 0 : index
    %1 = vector.load %arg3[%c0_1, %c0_2] : memref<32x128xf32, #tpu.memory_space<vmem>>, vector<32x128xf32>
    %c0_3 = arith.constant 0 : index
    %c0_4 = arith.constant 0 : index
    %2 = vector.load %arg4[%c0_3, %c0_4] : memref<1x128xf32, #tpu.memory_space<vmem>>, vector<1x128xf32>
    %c0_i32 = arith.constant 0 : i32
    %c5_i32 = arith.constant 5 : i32
    %3 = arith.addi %c0_i32, %c5_i32 : i32
    %c1_i32 = arith.constant 1 : i32
    scf.for %arg6 = %c0_i32 to %3 step %c1_i32  : i32 {
      %c64_i32 = arith.constant 64 : i32
      %4 = arith.muli %arg6, %c64_i32 : i32
      %5 = tpu.assume_multiple %4, 64 : i32
      %cst = arith.constant 0.000000e+00 : f32
      %6 = vector.broadcast %cst : f32 to vector<64x32xf32>
      %cst_6 = arith.constant 0.000000e+00 : f32
      %7 = vector.broadcast %cst_6 : f32 to vector<64x32xf32>
      %c0_7 = arith.constant 0 : index
      %c0_8 = arith.constant 0 : index
      %8 = arith.index_cast %5 : i32 to index
      %c0_9 = arith.constant 0 : index
      %9 = vector.load %arg1[%c0_7, %c0_8, %8, %c0_9] : memref<1x5x320x128xf32, #tpu.memory_space<vmem>>, vector<1x1x64x128xf32>
      %10 = vector.shape_cast %9 : vector<1x1x64x128xf32> to vector<64x128xf32>
      %cst_10 = arith.constant dense<0.000000e+00> : vector<64x128xf32>
      %11 = tpu.matmul %6, %0, %cst_10 {dimension_numbers = #tpu.dot_dimension_numbers<[1], [0], [0], [1], [0, 0, 1, 1], [], []>} : vector<64x32xf32>, vector<32x128xf32>, vector<64x128xf32> -> vector<64x128xf32>
      %12 = arith.addf %10, %11 : vector<64x128xf32>
      %13 = vector.extract_strided_slice %12 {offsets = [0, 0], sizes = [64, 96], strides = [1, 1]} : vector<64x128xf32> to vector<64x96xf32>
      %14 = arith.negf %13 : vector<64x96xf32>
      %15 = math.exp %14 : vector<64x96xf32>
      %cst_11 = arith.constant 1.000000e+00 : f32
      %16 = vector.broadcast %cst_11 : f32 to vector<64x96xf32>
      %17 = arith.addf %16, %15 : vector<64x96xf32>
      %18 = arith.divf %16, %17 : vector<64x96xf32>
      %19 = vector.extract_strided_slice %12 {offsets = [0, 96], sizes = [64, 32], strides = [1, 1]} : vector<64x128xf32> to vector<64x32xf32>
      %20 = math.tanh %19 : vector<64x32xf32>
      %21 = vector.extract_strided_slice %18 {offsets = [0, 0], sizes = [64, 32], strides = [1, 1]} : vector<64x96xf32> to vector<64x32xf32>
      %22 = vector.extract_strided_slice %18 {offsets = [0, 32], sizes = [64, 32], strides = [1, 1]} : vector<64x96xf32> to vector<64x32xf32>
      %23 = vector.extract_strided_slice %18 {offsets = [0, 64], sizes = [64, 32], strides = [1, 1]} : vector<64x96xf32> to vector<64x32xf32>
      %24 = arith.mulf %22, %7 : vector<64x32xf32>
      %25 = arith.mulf %21, %20 : vector<64x32xf32>
      %26 = arith.addf %24, %25 : vector<64x32xf32>
      %27 = math.tanh %26 : vector<64x32xf32>
      %28 = arith.mulf %23, %27 : vector<64x32xf32>
      %c0_12 = arith.constant 0 : index
      %c1 = arith.constant 1 : index
      %29 = arith.index_cast %5 : i32 to index
      %c0_13 = arith.constant 0 : index
      %30 = vector.load %arg1[%c0_12, %c1, %29, %c0_13] : memref<1x5x320x128xf32, #tpu.memory_space<vmem>>, vector<1x1x64x128xf32>
      %31 = vector.shape_cast %30 : vector<1x1x64x128xf32> to vector<64x128xf32>
      %cst_14 = arith.constant dense<0.000000e+00> : vector<64x128xf32>
      %32 = tpu.matmul %28, %0, %cst_14 {dimension_numbers = #tpu.dot_dimension_numbers<[1], [0], [0], [1], [0, 0, 1, 1], [], []>} : vector<64x32xf32>, vector<32x128xf32>, vector<64x128xf32> -> vector<64x128xf32>
      %33 = arith.addf %31, %32 : vector<64x128xf32>
      %34 = vector.extract_strided_slice %33 {offsets = [0, 0], sizes = [64, 96], strides = [1, 1]} : vector<64x128xf32> to vector<64x96xf32>
      %35 = arith.negf %34 : vector<64x96xf32>
      %36 = math.exp %35 : vector<64x96xf32>
      %cst_15 = arith.constant 1.000000e+00 : f32
      %37 = vector.broadcast %cst_15 : f32 to vector<64x96xf32>
      %38 = arith.addf %37, %36 : vector<64x96xf32>
      %39 = arith.divf %37, %38 : vector<64x96xf32>
      %40 = vector.extract_strided_slice %33 {offsets = [0, 96], sizes = [64, 32], strides = [1, 1]} : vector<64x128xf32> to vector<64x32xf32>
      %41 = math.tanh %40 : vector<64x32xf32>
      %42 = vector.extract_strided_slice %39 {offsets = [0, 0], sizes = [64, 32], strides = [1, 1]} : vector<64x96xf32> to vector<64x32xf32>
      %43 = vector.extract_strided_slice %39 {offsets = [0, 32], sizes = [64, 32], strides = [1, 1]} : vector<64x96xf32> to vector<64x32xf32>
      %44 = vector.extract_strided_slice %39 {offsets = [0, 64], sizes = [64, 32], strides = [1, 1]} : vector<64x96xf32> to vector<64x32xf32>
      %45 = arith.mulf %43, %26 : vector<64x32xf32>
      %46 = arith.mulf %42, %41 : vector<64x32xf32>
      %47 = arith.addf %45, %46 : vector<64x32xf32>
      %48 = math.tanh %47 : vector<64x32xf32>
      %49 = arith.mulf %44, %48 : vector<64x32xf32>
      %c0_16 = arith.constant 0 : index
      %c2 = arith.constant 2 : index
      %50 = arith.index_cast %5 : i32 to index
      %c0_17 = arith.constant 0 : index
      %51 = vector.load %arg1[%c0_16, %c2, %50, %c0_17] : memref<1x5x320x128xf32, #tpu.memory_space<vmem>>, vector<1x1x64x128xf32>
      %52 = vector.shape_cast %51 : vector<1x1x64x128xf32> to vector<64x128xf32>
      %cst_18 = arith.constant dense<0.000000e+00> : vector<64x128xf32>
      %53 = tpu.matmul %49, %0, %cst_18 {dimension_numbers = #tpu.dot_dimension_numbers<[1], [0], [0], [1], [0, 0, 1, 1], [], []>} : vector<64x32xf32>, vector<32x128xf32>, vector<64x128xf32> -> vector<64x128xf32>
      %54 = arith.addf %52, %53 : vector<64x128xf32>
      %55 = vector.extract_strided_slice %54 {offsets = [0, 0], sizes = [64, 96], strides = [1, 1]} : vector<64x128xf32> to vector<64x96xf32>
      %56 = arith.negf %55 : vector<64x96xf32>
      %57 = math.exp %56 : vector<64x96xf32>
      %cst_19 = arith.constant 1.000000e+00 : f32
      %58 = vector.broadcast %cst_19 : f32 to vector<64x96xf32>
      %59 = arith.addf %58, %57 : vector<64x96xf32>
      %60 = arith.divf %58, %59 : vector<64x96xf32>
      %61 = vector.extract_strided_slice %54 {offsets = [0, 96], sizes = [64, 32], strides = [1, 1]} : vector<64x128xf32> to vector<64x32xf32>
      %62 = math.tanh %61 : vector<64x32xf32>
      %63 = vector.extract_strided_slice %60 {offsets = [0, 0], sizes = [64, 32], strides = [1, 1]} : vector<64x96xf32> to vector<64x32xf32>
      %64 = vector.extract_strided_slice %60 {offsets = [0, 32], sizes = [64, 32], strides = [1, 1]} : vector<64x96xf32> to vector<64x32xf32>
      %65 = vector.extract_strided_slice %60 {offsets = [0, 64], sizes = [64, 32], strides = [1, 1]} : vector<64x96xf32> to vector<64x32xf32>
      %66 = arith.mulf %64, %47 : vector<64x32xf32>
      %67 = arith.mulf %63, %62 : vector<64x32xf32>
      %68 = arith.addf %66, %67 : vector<64x32xf32>
      %69 = math.tanh %68 : vector<64x32xf32>
      %70 = arith.mulf %65, %69 : vector<64x32xf32>
      %c0_20 = arith.constant 0 : index
      %c3 = arith.constant 3 : index
      %71 = arith.index_cast %5 : i32 to index
      %c0_21 = arith.constant 0 : index
      %72 = vector.load %arg1[%c0_20, %c3, %71, %c0_21] : memref<1x5x320x128xf32, #tpu.memory_space<vmem>>, vector<1x1x64x128xf32>
      %73 = vector.shape_cast %72 : vector<1x1x64x128xf32> to vector<64x128xf32>
      %cst_22 = arith.constant dense<0.000000e+00> : vector<64x128xf32>
      %74 = tpu.matmul %70, %0, %cst_22 {dimension_numbers = #tpu.dot_dimension_numbers<[1], [0], [0], [1], [0, 0, 1, 1], [], []>} : vector<64x32xf32>, vector<32x128xf32>, vector<64x128xf32> -> vector<64x128xf32>
      %75 = arith.addf %73, %74 : vector<64x128xf32>
      %76 = vector.extract_strided_slice %75 {offsets = [0, 0], sizes = [64, 96], strides = [1, 1]} : vector<64x128xf32> to vector<64x96xf32>
      %77 = arith.negf %76 : vector<64x96xf32>
      %78 = math.exp %77 : vector<64x96xf32>
      %cst_23 = arith.constant 1.000000e+00 : f32
      %79 = vector.broadcast %cst_23 : f32 to vector<64x96xf32>
      %80 = arith.addf %79, %78 : vector<64x96xf32>
      %81 = arith.divf %79, %80 : vector<64x96xf32>
      %82 = vector.extract_strided_slice %75 {offsets = [0, 96], sizes = [64, 32], strides = [1, 1]} : vector<64x128xf32> to vector<64x32xf32>
      %83 = math.tanh %82 : vector<64x32xf32>
      %84 = vector.extract_strided_slice %81 {offsets = [0, 0], sizes = [64, 32], strides = [1, 1]} : vector<64x96xf32> to vector<64x32xf32>
      %85 = vector.extract_strided_slice %81 {offsets = [0, 32], sizes = [64, 32], strides = [1, 1]} : vector<64x96xf32> to vector<64x32xf32>
      %86 = vector.extract_strided_slice %81 {offsets = [0, 64], sizes = [64, 32], strides = [1, 1]} : vector<64x96xf32> to vector<64x32xf32>
      %87 = arith.mulf %85, %68 : vector<64x32xf32>
      %88 = arith.mulf %84, %83 : vector<64x32xf32>
      %89 = arith.addf %87, %88 : vector<64x32xf32>
      %90 = math.tanh %89 : vector<64x32xf32>
      %91 = arith.mulf %86, %90 : vector<64x32xf32>
      %c0_24 = arith.constant 0 : index
      %c4 = arith.constant 4 : index
      %92 = arith.index_cast %5 : i32 to index
      %c0_25 = arith.constant 0 : index
      %93 = vector.load %arg1[%c0_24, %c4, %92, %c0_25] : memref<1x5x320x128xf32, #tpu.memory_space<vmem>>, vector<1x1x64x128xf32>
      %94 = vector.shape_cast %93 : vector<1x1x64x128xf32> to vector<64x128xf32>
      %cst_26 = arith.constant dense<0.000000e+00> : vector<64x128xf32>
      %95 = tpu.matmul %91, %0, %cst_26 {dimension_numbers = #tpu.dot_dimension_numbers<[1], [0], [0], [1], [0, 0, 1, 1], [], []>} : vector<64x32xf32>, vector<32x128xf32>, vector<64x128xf32> -> vector<64x128xf32>
      %96 = arith.addf %94, %95 : vector<64x128xf32>
      %97 = vector.extract_strided_slice %96 {offsets = [0, 0], sizes = [64, 96], strides = [1, 1]} : vector<64x128xf32> to vector<64x96xf32>
      %98 = arith.negf %97 : vector<64x96xf32>
      %99 = math.exp %98 : vector<64x96xf32>
      %cst_27 = arith.constant 1.000000e+00 : f32
      %100 = vector.broadcast %cst_27 : f32 to vector<64x96xf32>
      %101 = arith.addf %100, %99 : vector<64x96xf32>
      %102 = arith.divf %100, %101 : vector<64x96xf32>
      %103 = vector.extract_strided_slice %96 {offsets = [0, 96], sizes = [64, 32], strides = [1, 1]} : vector<64x128xf32> to vector<64x32xf32>
      %104 = math.tanh %103 : vector<64x32xf32>
      %105 = vector.extract_strided_slice %102 {offsets = [0, 0], sizes = [64, 32], strides = [1, 1]} : vector<64x96xf32> to vector<64x32xf32>
      %106 = vector.extract_strided_slice %102 {offsets = [0, 32], sizes = [64, 32], strides = [1, 1]} : vector<64x96xf32> to vector<64x32xf32>
      %107 = vector.extract_strided_slice %102 {offsets = [0, 64], sizes = [64, 32], strides = [1, 1]} : vector<64x96xf32> to vector<64x32xf32>
      %108 = arith.mulf %106, %89 : vector<64x32xf32>
      %109 = arith.mulf %105, %104 : vector<64x32xf32>
      %110 = arith.addf %108, %109 : vector<64x32xf32>
      %111 = math.tanh %110 : vector<64x32xf32>
      %112 = arith.mulf %107, %111 : vector<64x32xf32>
      %cst_28 = arith.constant dense<0.000000e+00> : vector<64x128xf32>
      %113 = tpu.matmul %112, %1, %cst_28 {dimension_numbers = #tpu.dot_dimension_numbers<[1], [0], [0], [1], [0, 0, 1, 1], [], []>} : vector<64x32xf32>, vector<32x128xf32>, vector<64x128xf32> -> vector<64x128xf32>
      %114 = vector.broadcast %2 : vector<1x128xf32> to vector<64x128xf32>
      %115 = arith.addf %113, %114 : vector<64x128xf32>
      %cst_29 = arith.constant dense<0xFF800000> : vector<64xf32>
      %116 = vector.multi_reduction <maximumf>, %115, %cst_29 [1] : vector<64x128xf32> to vector<64xf32>
      %117 = vector.shape_cast %116 : vector<64xf32> to vector<64x1xf32>
      %118 = vector.broadcast %117 : vector<64x1xf32> to vector<64x128xf32>
      %119 = arith.subf %115, %118 : vector<64x128xf32>
      %120 = math.exp %119 : vector<64x128xf32>
      %cst_30 = arith.constant dense<0.000000e+00> : vector<64xf32>
      %121 = vector.multi_reduction <add>, %120, %cst_30 [1] : vector<64x128xf32> to vector<64xf32>
      %122 = vector.shape_cast %121 : vector<64xf32> to vector<64x1xf32>
      %123 = math.log %122 : vector<64x1xf32>
      %124 = vector.broadcast %123 : vector<64x1xf32> to vector<64x128xf32>
      %125 = arith.subf %119, %124 : vector<64x128xf32>
      %c0_31 = arith.constant 0 : index
      %126 = arith.index_cast %5 : i32 to index
      %c0_32 = arith.constant 0 : index
      %127 = vector.load %arg5[%c0_31, %126, %c0_32] : memref<1x320x128xf32, #tpu.memory_space<vmem>>, vector<1x64x128xf32>
      %128 = vector.shape_cast %127 : vector<1x64x128xf32> to vector<64x128xf32>
      %129 = vector.shape_cast %125 : vector<64x128xf32> to vector<1x64x128xf32>
      tpu.vector_store %arg5[%c0_31, %126, %c0_32], %129 {strides = array<i32>} : memref<1x320x128xf32, #tpu.memory_space<vmem>>, vector<1x64x128xf32>,
    }
    %c5_i32_5 = arith.constant 5 : i32
    return
  }
  func.func @transform_0(%arg0: i32) -> (i32, i32, i32, i32) {
    %c0_i32 = arith.constant 0 : i32
    %c0_i32_0 = arith.constant 0 : i32
    %c0_i32_1 = arith.constant 0 : i32
    %c0_i32_2 = arith.constant 0 : i32
    return %arg0, %c0_i32, %c0_i32_0, %c0_i32_1 : i32, i32, i32, i32
  }
  func.func @transform_1(%arg0: i32) -> (i32, i32) {
    %c0_i32 = arith.constant 0 : i32
    %c0_i32_0 = arith.constant 0 : i32
    %c0_i32_1 = arith.constant 0 : i32
    return %c0_i32, %c0_i32_0 : i32, i32
  }
  func.func @transform_2(%arg0: i32) -> (i32, i32) {
    %c0_i32 = arith.constant 0 : i32
    %c0_i32_0 = arith.constant 0 : i32
    %c0_i32_1 = arith.constant 0 : i32
    return %c0_i32, %c0_i32_0 : i32, i32
  }
  func.func @transform_3(%arg0: i32) -> (i32, i32) {
    %c0_i32 = arith.constant 0 : i32
    %c0_i32_0 = arith.constant 0 : i32
    %c0_i32_1 = arith.constant 0 : i32
    return %c0_i32, %c0_i32_0 : i32, i32
  }
  func.func @transform_4(%arg0: i32) -> (i32, i32, i32) {
    %c0_i32 = arith.constant 0 : i32
    %c0_i32_0 = arith.constant 0 : i32
    %c0_i32_1 = arith.constant 0 : i32
    return %arg0, %c0_i32, %c0_i32_0 : i32, i32, i32
  }
}

</mosaic_0001>

<llo_original>
// kernel: tpu_custom_call.1
$region0: #{tpu_custom_call.1}
  #allocation0 [shape = 'u32[]', space=smem, size = 0x4, offset = 0x4, fixed_abs, tag = 'smem constant byte address 0x4 - core index']
  #allocation1 [shape = 'u32[144,128]{1,0:T(1,128)}', space=vmem, size = 0x12000, scoped, tag = 'internal scratch']
  %s0 = inlined_call_operand.hbm [shape: f32[2,5,320,128], index: 0, kind: input, shape index: {}]
  %s1 = inlined_call_operand.hbm [shape: f32[32,128], index: 1, kind: input, shape index: {}]
  %s2 = inlined_call_operand.hbm [shape: f32[32,128], index: 2, kind: input, shape index: {}]
  %s3 = inlined_call_operand.hbm [shape: f32[1,128], index: 3, kind: input, shape index: {}]
  %s4 = inlined_call_operand.hbm [shape: f32[2,320,128], index: 4, kind: output, shape index: {}]
  %s5 = sld [smem:[#allocation0]]
  $region72: #{tpu_custom_call.1} parent=0
    _
  %s7 = ssub.s32 1, %s5
  %s8 = scalar_select 0, %s7, %s5
  $region1: #{tpu_custom_call.1} parent=0
    #allocation2 [shape = 'u8[1638400]{0}', space=vmem, size = 0x190000, scoped, tag = 'input window, operand 0']
    #allocation3 [shape = 's32[2]{0}', space=sflag, size = 0x8, scoped, tag = 'scoped memory for tpu_custom_call.1']
    #allocation4 [shape = 's32[2]{0}', space=sflag, size = 0x8, scoped, tag = 'scoped memory for tpu_custom_call.1']
    #allocation5 [shape = 'u8[16384]{0}', space=vmem, size = 0x4000, scoped, tag = 'input window, operand 1, single buffered']
    #allocation6 [shape = 's32[1]{0}', space=sflag, size = 0x4, scoped, tag = 'scoped memory for tpu_custom_call.1']
    #allocation7 [shape = 'u8[16384]{0}', space=vmem, size = 0x4000, scoped, tag = 'input window, operand 2, single buffered']
    #allocation8 [shape = 'u8[512]{0}', space=vmem, size = 0x400, scoped, tag = 'input window, operand 3, single buffered']
    #allocation9 [shape = 's32[1]{0}', space=sflag, size = 0x4, scoped, tag = 'scoped memory for tpu_custom_call.1']
    #allocation10 [shape = 'u8[327680]{0}', space=vmem, size = 0x50000, scoped, tag = 'output window, operand 0']
    %9 = vsyncpa [#allocation3], 0
    %s10 = scalar_lea.sflag [#allocation3], 1
    %11 = vsyncpa %s10, 0
    %12 = vsyncpa [#allocation6], 0
    %13 = vsyncpa [#allocation9], 0
    %14 = vsyncpa [#allocation4], 0
    %s15 = scalar_lea.sflag [#allocation4], 1
    %16 = vsyncpa %s15, 0
    loop: start=0, step=1, limit=4
    $region2: #{tpu_custom_call.1} parent=1 // loop_pre_header
      _
    $region3: #{tpu_custom_call.1} parent=1 // loop_header
      %s18 = sphi 0, %s22
      %p19 = scmp.ge.s32.totalorder %s18, 4
      %s28 = sphi 0, %s30
      %s31 = sphi 0, %s28
      %s32 = sphi 0, %s31
      %s48 = sphi 0, %s32
      %s52 = sphi 0, %s52
      %s54 = sphi 0, %s52
      %s55 = sphi 0, %s54
      %s69 = sphi 0, %s55
      %s73 = sphi 0, %s73
      %s75 = sphi 0, %s73
      %s76 = sphi 0, %s75
      %s90 = sphi 0, %s76
      %s94 = sphi 0, %s94
      %s96 = sphi 0, %s94
      %s97 = sphi 0, %s96
      %s111 = sphi 0, %s97
      %s117 = sphi 0, %s119
      %s120 = sphi 0, %s117
      %s121 = sphi 0, %s120
      %s137 = sphi 0, %s121
    $region4: #{tpu_custom_call.1} parent=1 // loop_header_branch
      %21 = sbr.rel (%p19) target = $region8
    $region5: #{tpu_custom_call.1} parent=1 // loop_body
      %s23 = ssub.s32 %s18, 1
      %s24 = ssub.s32 %s18, 2
      %s25 = sadd.s32 %s18, 1
      %s26 = ssub.s32 %s18, %s25
      %p27 = scmp.eq.s32.totalorder %s26, 0
      %s29 = sadd.s32 %s28, 1
      %s30 = scalar_select %p27, %s28, %s29
      %p33 = pneg %p27
      %p34 = scmp.eq.s32.totalorder %s18, 1
      %p35 = por %p33, %p34
      %p36 = scmp.ne.s32.totalorder %s28, %s31
      %p37 = scmp.eq.s32.totalorder %s18, 0
      %p38 = por %p36, %p37
      %p39 = scmp.ne.s32.totalorder %s28, %s31
      %p40 = scmp.eq.s32.totalorder %s23, 1
      %p41 = por %p39, %p40
      %p42 = scmp.ne.s32.totalorder %s31, %s32
      %p43 = scmp.eq.s32.totalorder %s23, 0
      %p44 = por %p42, %p43
      %p45 = scmp.ne.s32.totalorder %s31, %s32
      %p46 = scmp.eq.s32.totalorder %s24, 1
      %p47 = por %p45, %p46
      %p49 = scmp.ne.s32.totalorder %s32, %s48
      %p50 = scmp.eq.s32.totalorder %s24, 0
      %p51 = por %p49, %p50
      %s53 = sadd.s32 %s52, 1
      %p56 = scmp.eq.s32.totalorder %s18, 1
      %p57 = scmp.ne.s32.totalorder %s52, %s54
      %p58 = scmp.eq.s32.totalorder %s18, 0
      %p59 = por %p57, %p58
      %p60 = scmp.ne.s32.totalorder %s52, %s54
      %p61 = scmp.eq.s32.totalorder %s23, 1
      %p62 = por %p60, %p61
      %p63 = scmp.ne.s32.totalorder %s54, %s55
      %p64 = scmp.eq.s32.totalorder %s23, 0
      %p65 = por %p63, %p64
      %p66 = scmp.ne.s32.totalorder %s54, %s55
      %p67 = scmp.eq.s32.totalorder %s24, 1
      %p68 = por %p66, %p67
      %p70 = scmp.ne.s32.totalorder %s55, %s69
      %p71 = scmp.eq.s32.totalorder %s24, 0
      %p72 = por %p70, %p71
      %s74 = sadd.s32 %s73, 1
      %p77 = scmp.eq.s32.totalorder %s18, 1
      %p78 = scmp.ne.s32.totalorder %s73, %s75
      %p79 = scmp.eq.s32.totalorder %s18, 0
      %p80 = por %p78, %p79
      %p81 = scmp.ne.s32.totalorder %s73, %s75
      %p82 = scmp.eq.s32.totalorder %s23, 1
      %p83 = por %p81, %p82
      %p84 = scmp.ne.s32.totalorder %s75, %s76
      %p85 = scmp.eq.s32.totalorder %s23, 0
      %p86 = por %p84, %p85
      %p87 = scmp.ne.s32.totalorder %s75, %s76
      %p88 = scmp.eq.s32.totalorder %s24, 1
      %p89 = por %p87, %p88
      %p91 = scmp.ne.s32.totalorder %s76, %s90
      %p92 = scmp.eq.s32.totalorder %s24, 0
      %p93 = por %p91, %p92
      %s95 = sadd.s32 %s94, 1
      %p98 = scmp.eq.s32.totalorder %s18, 1
      %p99 = scmp.ne.s32.totalorder %s94, %s96
      %p100 = scmp.eq.s32.totalorder %s18, 0
      %p101 = por %p99, %p100
      %p102 = scmp.ne.s32.totalorder %s94, %s96
      %p103 = scmp.eq.s32.totalorder %s23, 1
      %p104 = por %p102, %p103
      %p105 = scmp.ne.s32.totalorder %s96, %s97
      %p106 = scmp.eq.s32.totalorder %s23, 0
      %p107 = por %p105, %p106
      %p108 = scmp.ne.s32.totalorder %s96, %s97
      %p109 = scmp.eq.s32.totalorder %s24, 1
      %p110 = por %p108, %p109
      %p112 = scmp.ne.s32.totalorder %s97, %s111
      %p113 = scmp.eq.s32.totalorder %s24, 0
      %p114 = por %p112, %p113
      %s115 = ssub.s32 %s18, %s25
      %p116 = scmp.eq.s32.totalorder %s115, 0
      %s118 = sadd.s32 %s117, 1
      %s119 = scalar_select %p116, %s117, %s118
      %p122 = pneg %p116
      %p123 = scmp.eq.s32.totalorder %s18, 1
      %p124 = por %p122, %p123
      %p125 = scmp.ne.s32.totalorder %s117, %s120
      %p126 = scmp.eq.s32.totalorder %s18, 0
      %p127 = por %p125, %p126
      %p128 = scmp.ne.s32.totalorder %s117, %s120
      %p129 = scmp.eq.s32.totalorder %s23, 1
      %p130 = por %p128, %p129
      %p131 = scmp.ne.s32.totalorder %s120, %s121
      %p132 = scmp.eq.s32.totalorder %s23, 0
      %p133 = por %p131, %p132
      %p134 = scmp.ne.s32.totalorder %s120, %s121
      %p135 = scmp.eq.s32.totalorder %s24, 1
      %p136 = por %p134, %p135
      %p138 = scmp.ne.s32.totalorder %s121, %s137
      %p139 = scmp.eq.s32.totalorder %s24, 0
      %p140 = por %p138, %p139
      %p141 = scmp.le.s32.totalorder 1, %s18
      %p142 = scmp.lt.s32.totalorder %s18, 3
      %p143 = pnand %p141, %p142
      %p144 = pneg %p143
      // Predicated region
      $region9: #{tpu_custom_call.1} parent=5 // pred_check
        _
      $region10: #{tpu_custom_call.1} parent=5 // pred_check_branch
        %146 = sbr.rel (%p143) target = $region12
      $region11: #{tpu_custom_call.1} parent=5 // pred_region
        %s147 = ssub.s32 %s18, 1
        // Predicated region
        $region13: #{tpu_custom_call.1} parent=11 // pred_check
          %p148 = pneg %p65
        $region14: #{tpu_custom_call.1} parent=11 // pred_check_branch
          %150 = sbr.rel (%p148) target = $region16
        $region15: #{tpu_custom_call.1} parent=11 // pred_region
          %s152 = ssub.s32 512, 512
          %153 = vsyncadd [#allocation6], %s152
          %s154 = sshll.u32 [#allocation5], 4
          %s155 = int_to_ptr.vmem [resolvable:$true] %s154
          %160 = dma.hbm_to_vmem [thread:$0]  %s1, 512, %s155, [#allocation6], 128, 128, 8
        $region16: #{tpu_custom_call.1} parent=11 // pred_fallthru
          _
        // Predicated region
        $region17: #{tpu_custom_call.1} parent=11 // pred_check
          %p161 = pneg %p86
        $region18: #{tpu_custom_call.1} parent=11 // pred_check_branch
          %163 = sbr.rel (%p161) target = $region20
        $region19: #{tpu_custom_call.1} parent=11 // pred_region
          %s165 = ssub.s32 512, 512
          %166 = vsyncadd [#allocation6], %s165
          %s167 = sshll.u32 [#allocation7], 4
          %s168 = int_to_ptr.vmem [resolvable:$true] %s167
          %173 = dma.hbm_to_vmem [thread:$0]  %s2, 512, %s168, [#allocation6], 128, 128, 8
        $region20: #{tpu_custom_call.1} parent=11 // pred_fallthru
          _
        // Predicated region
        $region21: #{tpu_custom_call.1} parent=11 // pred_check
          %p174 = pneg %p107
        $region22: #{tpu_custom_call.1} parent=11 // pred_check_branch
          %176 = sbr.rel (%p174) target = $region24
        $region23: #{tpu_custom_call.1} parent=11 // pred_region
          %s178 = ssub.s32 16, 16
          %179 = vsyncadd [#allocation9], %s178
          %s181 = sshll.u32 [#allocation8], 4
          %s182 = int_to_ptr.vmem [resolvable:$true] %s181
          %184 = dma.hbm_to_vmem [thread:$0]  %s3, 16, %s182, [#allocation9]
        $region24: #{tpu_custom_call.1} parent=11 // pred_fallthru
          _
      $region12: #{tpu_custom_call.1} parent=5 // pred_fallthru
        _
      %p185 = scmp.lt.s32.totalorder %s18, 2
      // Predicated region
      $region25: #{tpu_custom_call.1} parent=5 // pred_check
        %p186 = pneg %p185
      $region26: #{tpu_custom_call.1} parent=5 // pred_check_branch
        %188 = sbr.rel (%p186) target = $region28
      $region27: #{tpu_custom_call.1} parent=5 // pred_region
        // Predicated region
        $region29: #{tpu_custom_call.1} parent=27 // pred_check
          %p189 = pneg %p38
        $region30: #{tpu_custom_call.1} parent=27 // pred_check_branch
          %191 = sbr.rel (%p189) target = $region32
        $region31: #{tpu_custom_call.1} parent=27 // pred_region
          %s192 = sand.u32 %s28, 1
          %s193 = scalar_lea.sflag [#allocation3], %s192
          %s194 = sand.u32 %s28, 1
          %s195 = smul.addr %s194, 1600
          %s196 = scalar_lea.vmem [#allocation2], %s195
          %s198 = ssub.s32 25600, 25600
          %199 = vsyncadd %s193, %s198
          %s200 = smul.addr %s18, 200
          %s201 = smul.addr %s200, 128
          %s202 = scalar_lea.hbm %s0, %s201
          %s203 = sshll.u32 %s196, 4
          %s204 = int_to_ptr.vmem [resolvable:$true] %s203
          %209 = dma.hbm_to_vmem [thread:$0]  %s202, 25600, %s204, %s193, 128, 128, 8
        $region32: #{tpu_custom_call.1} parent=27 // pred_fallthru
          _
      $region28: #{tpu_custom_call.1} parent=5 // pred_fallthru
        _
      %p210 = scmp.le.s32.totalorder 1, %s18
      %p211 = scmp.lt.s32.totalorder %s18, 3
      %p212 = pnand %p210, %p211
      %p213 = pneg %p212
      // Predicated region
      $region33: #{tpu_custom_call.1} parent=5 // pred_check
        _
      $region34: #{tpu_custom_call.1} parent=5 // pred_check_branch
        %215 = sbr.rel (%p212) target = $region36
      $region35: #{tpu_custom_call.1} parent=5 // pred_region
        %s216 = ssub.s32 %s18, 1
        %s217 = sand.u32 %s31, 1
        %s218 = scalar_lea.sflag [#allocation3], %s217
        %s219 = sand.u32 %s31, 1
        %s220 = smul.addr %s219, 1600
        %s221 = scalar_lea.vmem [#allocation2], %s220
        // Predicated region
        $region37: #{tpu_custom_call.1} parent=35 // pred_check
          %p222 = pneg %p44
        $region38: #{tpu_custom_call.1} parent=35 // pred_check_branch
          %224 = sbr.rel (%p222) target = $region40
        $region39: #{tpu_custom_call.1} parent=35 // pred_region
          %225 = dma.done %s218, 25600
        $region40: #{tpu_custom_call.1} parent=35 // pred_fallthru
          _
        // Predicated region
        $region41: #{tpu_custom_call.1} parent=35 // pred_check
          %p226 = pneg %p65
        $region42: #{tpu_custom_call.1} parent=35 // pred_check_branch
          %228 = sbr.rel (%p226) target = $region44
        $region43: #{tpu_custom_call.1} parent=35 // pred_region
          %229 = dma.done [#allocation6], 512
        $region44: #{tpu_custom_call.1} parent=35 // pred_fallthru
          _
        // Predicated region
        $region45: #{tpu_custom_call.1} parent=35 // pred_check
          %p230 = pneg %p86
        $region46: #{tpu_custom_call.1} parent=35 // pred_check_branch
          %232 = sbr.rel (%p230) target = $region48
        $region47: #{tpu_custom_call.1} parent=35 // pred_region
          %233 = dma.done [#allocation6], 512
        $region48: #{tpu_custom_call.1} parent=35 // pred_fallthru
          _
        // Predicated region
        $region49: #{tpu_custom_call.1} parent=35 // pred_check
          %p234 = pneg %p107
        $region50: #{tpu_custom_call.1} parent=35 // pred_check_branch
          %236 = sbr.rel (%p234) target = $region52
        $region51: #{tpu_custom_call.1} parent=35 // pred_region
          %237 = dma.done [#allocation9], 16
        $region52: #{tpu_custom_call.1} parent=35 // pred_fallthru
          _
        %s238 = sand.u32 %s31, 1
        %s239 = scalar_lea.sflag [#allocation3], %s238
        %s240 = sand.u32 %s31, 1
        %s241 = smul.addr %s240, 1600
        %s242 = scalar_lea.vmem [#allocation2], %s241
        %p243 = pneg %p44
        %p244 = pneg %p41
        %p245 = pneg %p65
        %p246 = pneg %p62
        %p247 = pneg %p86
        %p248 = pneg %p83
        %p249 = pneg %p107
        %p250 = pneg %p104
        %p251 = pneg %p133
        %p252 = pneg %p130
        %s253 = sand.u32 %s120, 1
        %s254 = scalar_lea.sflag [#allocation4], %s253
        %s255 = sand.u32 %s120, 1
        %s256 = smul.addr %s255, 320
        %s257 = scalar_lea.vmem [#allocation10], %s256
        %v258 = vld [vmem:[#allocation5] sm:$0xff]
        %v259 = vld [vmem:[#allocation5 + $0x8] sm:$0xff]
        %v260 = vld [vmem:[#allocation5 + $0x10] sm:$0xff]
        %v261 = vld [vmem:[#allocation5 + $0x18] sm:$0xff]
        %v262 = vld [vmem:[#allocation7] sm:$0xff]
        %v263 = vld [vmem:[#allocation7 + $0x8] sm:$0xff]
        %v264 = vld [vmem:[#allocation7 + $0x10] sm:$0xff]
        %v265 = vld [vmem:[#allocation7 + $0x18] sm:$0xff]
        %v266 = vld [vmem:[#allocation8] sm:$0x1]
        loop: start=0, step=1, limit=5
        $region53: #{tpu_custom_call.1} parent=35 // loop_pre_header
          _
        $region54: #{tpu_custom_call.1} parent=35 // loop_header
          %s268 = sphi 0, %s272
          %p269 = scmp.ge.s32.totalorder %s268, 5
        $region55: #{tpu_custom_call.1} parent=35 // loop_header_branch
          %271 = sbr.rel (%p269) target = $region59
        $region56: #{tpu_custom_call.1} parent=35 // loop_body
          %s273 = smul.u32 %s268, 64
          %s274 = scalar_lea.vmem %s221, %s273 [#allocation2]
          %v275 = vld [vmem:[%s274] sm:$0xff]
          %v276 = vld [vmem:[%s274 + $0x8] sm:$0xff]
          %v277 = vld [vmem:[%s274 + $0x10] sm:$0xff]
          %v278 = vld [vmem:[%s274 + $0x18] sm:$0xff]
          %v279 = vld [vmem:[%s274 + $0x20] sm:$0xff]
          %v280 = vld [vmem:[%s274 + $0x28] sm:$0xff]
          %v281 = vld [vmem:[%s274 + $0x30] sm:$0xff]
          %v282 = vld [vmem:[%s274 + $0x38] sm:$0xff]
          %vm283 = vcmask 261120
          %v285 = vsel %vm283, 0.0, 0
          %287 = vmatprep.subr.mxu0 0.0
          %288 = vmatpush1.msra.mxu0 %v258
          %289 = vmatprep.subr.mxu0 0.0
          %290 = vmatpush1.msra.mxu0 %v259
          %291 = vmatprep.subr.mxu0 0.0
          %292 = vmatpush1.msra.mxu0 %v260
          %293 = vmatprep.subr.mxu0 0.0
          %294 = vmatpush1.msra.mxu0 %v261
          %295 = vmatprep.subr.mxu0 0.0
          %296 = vmatpush1.msra.mxu0 0.0
          %297 = vmatprep.subr.mxu0 0.0
          %298 = vmatpush1.msra.mxu0 0.0
          %299 = vmatprep.subr.mxu0 0.0
          %300 = vmatpush1.msra.mxu0 0.0
          %301 = vmatprep.subr.mxu0 0.0
          %302 = vmatpush1.msra.mxu0 0.0
          %303 = vmatprep.subr.mxu0 0.0
          %304 = vmatpush1.msra.mxu0 0.0
          %305 = vmatprep.subr.mxu0 0.0
          %306 = vmatpush1.msra.mxu0 0.0
          %307 = vmatprep.subr.mxu0 0.0
          %308 = vmatpush1.msra.mxu0 0.0
          %309 = vmatprep.subr.mxu0 0.0
          %310 = vmatpush1.msra.mxu0 0.0
          %311 = vmatprep.subr.mxu0 0.0
          %312 = vmatpush1.msra.mxu0 0.0
          %313 = vmatprep.subr.mxu0 0.0
          %314 = vmatpush1.msra.mxu0 0.0
          %315 = vmatprep.subr.mxu0 0.0
          %316 = vmatpush1.msra.mxu0 0.0
          %317 = vmatprep.subr.mxu0 0.0
          %318 = vmatpush1.msra.mxu0 0.0
          %319 = vmatprep.subr.mxu0 0.0
          %320 = vmatpush1.msra.mxu0 0.0
          %321 = vmatprep.subr.mxu0 0.0
          %322 = vmatpush1.msra.mxu0 0.0
          %323 = vmatprep.subr.mxu0 0.0
          %324 = vmatpush1.msra.mxu0 0.0
          %325 = vmatprep.subr.mxu0 0.0
          %326 = vmatpush1.msra.mxu0 0.0
          %327 = vmatprep.subr.mxu0 0.0
          %328 = vmatpush1.msra.mxu0 0.0
          %329 = vmatprep.subr.mxu0 0.0
          %330 = vmatpush1.msra.mxu0 0.0
          %331 = vmatprep.subr.mxu0 0.0
          %332 = vmatpush1.msra.mxu0 0.0
          %333 = vmatprep.subr.mxu0 0.0
          %334 = vmatpush1.msra.mxu0 0.0
          %335 = vmatprep.subr.mxu0 0.0
          %336 = vmatpush1.msra.mxu0 0.0
          %337 = vmatprep.subr.mxu0 0.0
          %338 = vmatpush1.msra.mxu0 0.0
          %339 = vmatprep.subr.mxu0 0.0
          %340 = vmatpush1.msra.mxu0 0.0
          %341 = vmatprep.subr.mxu0 0.0
          %342 = vmatpush1.msra.mxu0 0.0
          %343 = vmatprep.subr.mxu0 0.0
          %344 = vmatpush1.msra.mxu0 0.0
          %345 = vmatprep.subr.mxu0 0.0
          %346 = vmatpush1.msra.mxu0 0.0
          %347 = vmatprep.subr.mxu0 0.0
          %348 = vmatpush1.msra.mxu0 0.0
          %349 = vmatprep.subr.mxu0 0.0
          %350 = vmatpush1.msra.mxu0 0.0
          %351 = vmatprep.mubr.f32.mxu0 0.0
          %352 = vmatmul.mubr.f32.gmra.mrb[0].mxu0 %v285
          %v353 = vpop.f32.mrb[0].mxu0
          %v354 = vadd.f32 0.0, %v353
          %v355 = vpop.f32.mrb[0].mxu0
          %356 = vmatprep.mubr.f32.mxu0 0.0
          %357 = vmatmul.mubr.f32.gmra.mrb[0].mxu0 %v285
          %v358 = vpop.f32.mrb[0].mxu0
          %v359 = vadd.f32 0.0, %v358
          %v360 = vpop.f32.mrb[0].mxu0
          %361 = vmatprep.mubr.f32.mxu0 0.0
          %362 = vmatmul.mubr.f32.gmra.mrb[0].mxu0 %v285
          %v363 = vpop.f32.mrb[0].mxu0
          %v364 = vadd.f32 0.0, %v363
          %v365 = vpop.f32.mrb[0].mxu0
          %366 = vmatprep.mubr.f32.mxu0 0.0
          %367 = vmatmul.mubr.f32.gmra.mrb[0].mxu0 %v285
          %v368 = vpop.f32.mrb[0].mxu0
          %v369 = vadd.f32 0.0, %v368
          %v370 = vpop.f32.mrb[0].mxu0
          %371 = vmatprep.mubr.f32.mxu0 0.0
          %372 = vmatmul.mubr.f32.gmra.mrb[0].mxu0 %v285
          %v373 = vpop.f32.mrb[0].mxu0
          %v374 = vadd.f32 0.0, %v373
          %v375 = vpop.f32.mrb[0].mxu0
          %376 = vmatprep.mubr.f32.mxu0 0.0
          %377 = vmatmul.mubr.f32.gmra.mrb[0].mxu0 %v285
          %v378 = vpop.f32.mrb[0].mxu0
          %v379 = vadd.f32 0.0, %v378
          %v380 = vpop.f32.mrb[0].mxu0
          %381 = vmatprep.mubr.f32.mxu0 0.0
          %382 = vmatmul.mubr.f32.gmra.mrb[0].mxu0 %v285
          %v383 = vpop.f32.mrb[0].mxu0
          %v384 = vadd.f32 0.0, %v383
          %v385 = vpop.f32.mrb[0].mxu0
          %386 = vmatprep.mubr.f32.mxu0 0.0
          %387 = vmatmul.mubr.f32.gmra.mrb[0].mxu0 %v285
          %v388 = vpop.f32.mrb[0].mxu0
          %v389 = vadd.f32 0.0, %v388
          %v390 = vpop.f32.mrb[0].mxu0
          %391 = vdwg.mxu0
          %v392 = vadd.f32 %v275, %v354
          %v393 = vadd.f32 %v276, %v359
          %v394 = vadd.f32 %v277, %v364
          %v395 = vadd.f32 %v278, %v369
          %v396 = vadd.f32 %v279, %v374
          %v397 = vadd.f32 %v280, %v379
          %v398 = vadd.f32 %v281, %v384
          %v399 = vadd.f32 %v282, %v389
          %v400 = vxor.u32 %v392, 2147483648
          %v401 = vxor.u32 %v393, 2147483648
          %v402 = vxor.u32 %v394, 2147483648
          %v403 = vxor.u32 %v395, 2147483648
          %v404 = vxor.u32 %v396, 2147483648
          %v405 = vxor.u32 %v397, 2147483648
          %v406 = vxor.u32 %v398, 2147483648
          %v407 = vxor.u32 %v399, 2147483648
          %v408 = vmul.f32 %v400, 1.442695
          %v409 = vpow.pop %v408
          %v410 = vmul.f32 %v401, 1.442695
          %v411 = vpow.pop %v410
          %v412 = vmul.f32 %v402, 1.442695
          %v413 = vpow.pop %v412
          %v414 = vmul.f32 %v403, 1.442695
          %v415 = vpow.pop %v414
          %v416 = vmul.f32 %v404, 1.442695
          %v417 = vpow.pop %v416
          %v418 = vmul.f32 %v405, 1.442695
          %v419 = vpow.pop %v418
          %v420 = vmul.f32 %v406, 1.442695
          %v421 = vpow.pop %v420
          %v422 = vmul.f32 %v407, 1.442695
          %v423 = vpow.pop %v422
          %v424 = vadd.f32 %v409, 1.0
          %v425 = vadd.f32 %v411, 1.0
          %v426 = vadd.f32 %v413, 1.0
          %v427 = vadd.f32 %v415, 1.0
          %v428 = vadd.f32 %v417, 1.0
          %v429 = vadd.f32 %v419, 1.0
          %v430 = vadd.f32 %v421, 1.0
          %v431 = vadd.f32 %v423, 1.0
          %v432 = vrcp.pop %v424
          %v433 = vmul.f32 1.0, %v432
          %v434 = vrcp.pop %v425
          %v435 = vmul.f32 1.0, %v434
          %v436 = vrcp.pop %v426
          %v437 = vmul.f32 1.0, %v436
          %v438 = vrcp.pop %v427
          %v439 = vmul.f32 1.0, %v438
          %v440 = vrcp.pop %v428
          %v441 = vmul.f32 1.0, %v440
          %v442 = vrcp.pop %v429
          %v443 = vmul.f32 1.0, %v442
          %v444 = vrcp.pop %v430
          %v445 = vmul.f32 1.0, %v444
          %v446 = vrcp.pop %v431
          %v447 = vmul.f32 1.0, %v446
          %v448 = vtanh.pop %v392
          %v449 = vtanh.pop %v393
          %v450 = vtanh.pop %v394
          %v451 = vtanh.pop %v395
          %v452 = vtanh.pop %v396
          %v453 = vtanh.pop %v397
          %v454 = vtanh.pop %v398
          %v455 = vtanh.pop %v399
          %v456 = vmul.f32 %v433, 0.0
          %v457 = vmul.f32 %v435, 0.0
          %v458 = vmul.f32 %v437, 0.0
          %v459 = vmul.f32 %v439, 0.0
          %v460 = vmul.f32 %v441, 0.0
          %v461 = vmul.f32 %v443, 0.0
          %v462 = vmul.f32 %v445, 0.0
          %v463 = vmul.f32 %v447, 0.0
          %472 = vrot.lane.b32.xlu0 %v448, 32
          %v473 = vpop.permute.xlu0 %472
          %474 = vrot.lane.b32.xlu0 %v449, 32
          %v475 = vpop.permute.xlu0 %474
          %476 = vrot.lane.b32.xlu0 %v450, 32
          %v477 = vpop.permute.xlu0 %476
          %478 = vrot.lane.b32.xlu0 %v451, 32
          %v479 = vpop.permute.xlu0 %478
          %480 = vrot.lane.b32.xlu0 %v452, 32
          %v481 = vpop.permute.xlu0 %480
          %482 = vrot.lane.b32.xlu0 %v453, 32
          %v483 = vpop.permute.xlu0 %482
          %484 = vrot.lane.b32.xlu0 %v454, 32
          %v485 = vpop.permute.xlu0 %484
          %486 = vrot.lane.b32.xlu0 %v455, 32
          %v487 = vpop.permute.xlu0 %486
          %v496 = vmul.f32 %v433, %v473
          %v497 = vmul.f32 %v435, %v475
          %v498 = vmul.f32 %v437, %v477
          %v499 = vmul.f32 %v439, %v479
          %v500 = vmul.f32 %v441, %v481
          %v501 = vmul.f32 %v443, %v483
          %v502 = vmul.f32 %v445, %v485
          %v503 = vmul.f32 %v447, %v487
          %512 = vrot.lane.b32.xlu0 %v496, 32
          %v513 = vpop.permute.xlu0 %512
          %514 = vrot.lane.b32.xlu0 %v497, 32
          %v515 = vpop.permute.xlu0 %514
          %516 = vrot.lane.b32.xlu0 %v498, 32
          %v517 = vpop.permute.xlu0 %516
          %518 = vrot.lane.b32.xlu0 %v499, 32
          %v519 = vpop.permute.xlu0 %518
          %520 = vrot.lane.b32.xlu0 %v500, 32
          %v521 = vpop.permute.xlu0 %520
          %522 = vrot.lane.b32.xlu0 %v501, 32
          %v523 = vpop.permute.xlu0 %522
          %524 = vrot.lane.b32.xlu0 %v502, 32
          %v525 = vpop.permute.xlu0 %524
          %526 = vrot.lane.b32.xlu0 %v503, 32
          %v527 = vpop.permute.xlu0 %526
          %v536 = vadd.f32 %v456, %v513
          %v537 = vadd.f32 %v457, %v515
          %v538 = vadd.f32 %v458, %v517
          %v539 = vadd.f32 %v459, %v519
          %v540 = vadd.f32 %v460, %v521
          %v541 = vadd.f32 %v461, %v523
          %v542 = vadd.f32 %v462, %v525
          %v543 = vadd.f32 %v463, %v527
          %v544 = vtanh.pop %v536
          %v545 = vtanh.pop %v537
          %v546 = vtanh.pop %v538
          %v547 = vtanh.pop %v539
          %v548 = vtanh.pop %v540
          %v549 = vtanh.pop %v541
          %v550 = vtanh.pop %v542
          %v551 = vtanh.pop %v543
          %560 = vrot.lane.b32.xlu0 %v544, 32
          %v561 = vpop.permute.xlu0 %560
          %562 = vrot.lane.b32.xlu0 %v545, 32
          %v563 = vpop.permute.xlu0 %562
          %564 = vrot.lane.b32.xlu0 %v546, 32
          %v565 = vpop.permute.xlu0 %564
          %566 = vrot.lane.b32.xlu0 %v547, 32
          %v567 = vpop.permute.xlu0 %566
          %568 = vrot.lane.b32.xlu0 %v548, 32
          %v569 = vpop.permute.xlu0 %568
          %570 = vrot.lane.b32.xlu0 %v549, 32
          %v571 = vpop.permute.xlu0 %570
          %572 = vrot.lane.b32.xlu0 %v550, 32
          %v573 = vpop.permute.xlu0 %572
          %574 = vrot.lane.b32.xlu0 %v551, 32
          %v575 = vpop.permute.xlu0 %574
          %v584 = vmul.f32 %v433, %v561
          %v585 = vmul.f32 %v435, %v563
          %v586 = vmul.f32 %v437, %v565
          %v587 = vmul.f32 %v439, %v567
          %v588 = vmul.f32 %v441, %v569
          %v589 = vmul.f32 %v443, %v571
          %v590 = vmul.f32 %v445, %v573
          %v591 = vmul.f32 %v447, %v575
          %s592 = sadd.s32 %s273, 320
          %s593 = scalar_lea.vmem %s221, %s592 [#allocation2]
          %v594 = vld [vmem:[%s593] sm:$0xff]
          %v595 = vld [vmem:[%s593 + $0x8] sm:$0xff]
          %v596 = vld [vmem:[%s593 + $0x10] sm:$0xff]
          %v597 = vld [vmem:[%s593 + $0x18] sm:$0xff]
          %v598 = vld [vmem:[%s593 + $0x20] sm:$0xff]
          %v599 = vld [vmem:[%s593 + $0x28] sm:$0xff]
          %v600 = vld [vmem:[%s593 + $0x30] sm:$0xff]
          %v601 = vld [vmem:[%s593 + $0x38] sm:$0xff]
          %610 = vrot.lane.b32.xlu0 %v584, 64
          %v611 = vpop.permute.xlu0 %610
          %612 = vrot.lane.b32.xlu0 %v585, 64
          %v613 = vpop.permute.xlu0 %612
          %614 = vrot.lane.b32.xlu0 %v586, 64
          %v615 = vpop.permute.xlu0 %614
          %616 = vrot.lane.b32.xlu0 %v587, 64
          %v617 = vpop.permute.xlu0 %616
          %618 = vrot.lane.b32.xlu0 %v588, 64
          %v619 = vpop.permute.xlu0 %618
          %620 = vrot.lane.b32.xlu0 %v589, 64
          %v621 = vpop.permute.xlu0 %620
          %622 = vrot.lane.b32.xlu0 %v590, 64
          %v623 = vpop.permute.xlu0 %622
          %624 = vrot.lane.b32.xlu0 %v591, 64
          %v625 = vpop.permute.xlu0 %624
          %v626 = vsel %vm283, %v611, 0
          %v628 = vsel %vm283, %v613, 0
          %v630 = vsel %vm283, %v615, 0
          %v632 = vsel %vm283, %v617, 0
          %v634 = vsel %vm283, %v619, 0
          %v636 = vsel %vm283, %v621, 0
          %v638 = vsel %vm283, %v623, 0
          %v640 = vsel %vm283, %v625, 0
          %642 = vmatprep.subr.mxu0 0.0
          %643 = vmatpush1.msra.mxu0 %v258
          %644 = vmatprep.subr.mxu0 0.0
          %645 = vmatpush1.msra.mxu0 %v259
          %646 = vmatprep.subr.mxu0 0.0
          %647 = vmatpush1.msra.mxu0 %v260
          %648 = vmatprep.subr.mxu0 0.0
          %649 = vmatpush1.msra.mxu0 %v261
          %650 = vmatprep.subr.mxu0 0.0
          %651 = vmatpush1.msra.mxu0 0.0
          %652 = vmatprep.subr.mxu0 0.0
          %653 = vmatpush1.msra.mxu0 0.0
          %654 = vmatprep.subr.mxu0 0.0
          %655 = vmatpush1.msra.mxu0 0.0
          %656 = vmatprep.subr.mxu0 0.0
          %657 = vmatpush1.msra.mxu0 0.0
          %658 = vmatprep.subr.mxu0 0.0
          %659 = vmatpush1.msra.mxu0 0.0
          %660 = vmatprep.subr.mxu0 0.0
          %661 = vmatpush1.msra.mxu0 0.0
          %662 = vmatprep.subr.mxu0 0.0
          %663 = vmatpush1.msra.mxu0 0.0
          %664 = vmatprep.subr.mxu0 0.0
          %665 = vmatpush1.msra.mxu0 0.0
          %666 = vmatprep.subr.mxu0 0.0
          %667 = vmatpush1.msra.mxu0 0.0
          %668 = vmatprep.subr.mxu0 0.0
          %669 = vmatpush1.msra.mxu0 0.0
          %670 = vmatprep.subr.mxu0 0.0
          %671 = vmatpush1.msra.mxu0 0.0
          %672 = vmatprep.subr.mxu0 0.0
          %673 = vmatpush1.msra.mxu0 0.0
          %674 = vmatprep.subr.mxu0 0.0
          %675 = vmatpush1.msra.mxu0 0.0
          %676 = vmatprep.subr.mxu0 0.0
          %677 = vmatpush1.msra.mxu0 0.0
          %678 = vmatprep.subr.mxu0 0.0
          %679 = vmatpush1.msra.mxu0 0.0
          %680 = vmatprep.subr.mxu0 0.0
          %681 = vmatpush1.msra.mxu0 0.0
          %682 = vmatprep.subr.mxu0 0.0
          %683 = vmatpush1.msra.mxu0 0.0
          %684 = vmatprep.subr.mxu0 0.0
          %685 = vmatpush1.msra.mxu0 0.0
          %686 = vmatprep.subr.mxu0 0.0
          %687 = vmatpush1.msra.mxu0 0.0
          %688 = vmatprep.subr.mxu0 0.0
          %689 = vmatpush1.msra.mxu0 0.0
          %690 = vmatprep.subr.mxu0 0.0
          %691 = vmatpush1.msra.mxu0 0.0
          %692 = vmatprep.subr.mxu0 0.0
          %693 = vmatpush1.msra.mxu0 0.0
          %694 = vmatprep.subr.mxu0 0.0
          %695 = vmatpush1.msra.mxu0 0.0
          %696 = vmatprep.subr.mxu0 0.0
          %697 = vmatpush1.msra.mxu0 0.0
          %698 = vmatprep.subr.mxu0 0.0
          %699 = vmatpush1.msra.mxu0 0.0
          %700 = vmatprep.subr.mxu0 0.0
          %701 = vmatpush1.msra.mxu0 0.0
          %702 = vmatprep.subr.mxu0 0.0
          %703 = vmatpush1.msra.mxu0 0.0
          %704 = vmatprep.subr.mxu0 0.0
          %705 = vmatpush1.msra.mxu0 0.0
          %706 = vmatprep.mubr.f32.mxu0 0.0
          %707 = vmatmul.mubr.f32.gmra.mrb[0].mxu0 %v626
          %v708 = vpop.f32.mrb[0].mxu0
          %v709 = vadd.f32 0.0, %v708
          %v710 = vpop.f32.mrb[0].mxu0
          %711 = vmatprep.mubr.f32.mxu0 0.0
          %712 = vmatmul.mubr.f32.gmra.mrb[0].mxu0 %v628
          %v713 = vpop.f32.mrb[0].mxu0
          %v714 = vadd.f32 0.0, %v713
          %v715 = vpop.f32.mrb[0].mxu0
          %716 = vmatprep.mubr.f32.mxu0 0.0
          %717 = vmatmul.mubr.f32.gmra.mrb[0].mxu0 %v630
          %v718 = vpop.f32.mrb[0].mxu0
          %v719 = vadd.f32 0.0, %v718
          %v720 = vpop.f32.mrb[0].mxu0
          %721 = vmatprep.mubr.f32.mxu0 0.0
          %722 = vmatmul.mubr.f32.gmra.mrb[0].mxu0 %v632
          %v723 = vpop.f32.mrb[0].mxu0
          %v724 = vadd.f32 0.0, %v723
          %v725 = vpop.f32.mrb[0].mxu0
          %726 = vmatprep.mubr.f32.mxu0 0.0
          %727 = vmatmul.mubr.f32.gmra.mrb[0].mxu0 %v634
          %v728 = vpop.f32.mrb[0].mxu0
          %v729 = vadd.f32 0.0, %v728
          %v730 = vpop.f32.mrb[0].mxu0
          %731 = vmatprep.mubr.f32.mxu0 0.0
          %732 = vmatmul.mubr.f32.gmra.mrb[0].mxu0 %v636
          %v733 = vpop.f32.mrb[0].mxu0
          %v734 = vadd.f32 0.0, %v733
          %v735 = vpop.f32.mrb[0].mxu0
          %736 = vmatprep.mubr.f32.mxu0 0.0
          %737 = vmatmul.mubr.f32.gmra.mrb[0].mxu0 %v638
          %v738 = vpop.f32.mrb[0].mxu0
          %v739 = vadd.f32 0.0, %v738
          %v740 = vpop.f32.mrb[0].mxu0
          %741 = vmatprep.mubr.f32.mxu0 0.0
          %742 = vmatmul.mubr.f32.gmra.mrb[0].mxu0 %v640
          %v743 = vpop.f32.mrb[0].mxu0
          %v744 = vadd.f32 0.0, %v743
          %v745 = vpop.f32.mrb[0].mxu0
          %746 = vdwg.mxu0
          %v747 = vadd.f32 %v594, %v709
          %v748 = vadd.f32 %v595, %v714
          %v749 = vadd.f32 %v596, %v719
          %v750 = vadd.f32 %v597, %v724
          %v751 = vadd.f32 %v598, %v729
          %v752 = vadd.f32 %v599, %v734
          %v753 = vadd.f32 %v600, %v739
          %v754 = vadd.f32 %v601, %v744
          %v755 = vxor.u32 %v747, 2147483648
          %v756 = vxor.u32 %v748, 2147483648
          %v757 = vxor.u32 %v749, 2147483648
          %v758 = vxor.u32 %v750, 2147483648
          %v759 = vxor.u32 %v751, 2147483648
          %v760 = vxor.u32 %v752, 2147483648
          %v761 = vxor.u32 %v753, 2147483648
          %v762 = vxor.u32 %v754, 2147483648
          %v763 = vmul.f32 %v755, 1.442695
          %v764 = vpow.pop %v763
          %v765 = vmul.f32 %v756, 1.442695
          %v766 = vpow.pop %v765
          %v767 = vmul.f32 %v757, 1.442695
          %v768 = vpow.pop %v767
          %v769 = vmul.f32 %v758, 1.442695
          %v770 = vpow.pop %v769
          %v771 = vmul.f32 %v759, 1.442695
          %v772 = vpow.pop %v771
          %v773 = vmul.f32 %v760, 1.442695
          %v774 = vpow.pop %v773
          %v775 = vmul.f32 %v761, 1.442695
          %v776 = vpow.pop %v775
          %v777 = vmul.f32 %v762, 1.442695
          %v778 = vpow.pop %v777
          %v779 = vadd.f32 %v764, 1.0
          %v780 = vadd.f32 %v766, 1.0
          %v781 = vadd.f32 %v768, 1.0
          %v782 = vadd.f32 %v770, 1.0
          %v783 = vadd.f32 %v772, 1.0
          %v784 = vadd.f32 %v774, 1.0
          %v785 = vadd.f32 %v776, 1.0
          %v786 = vadd.f32 %v778, 1.0
          %v787 = vrcp.pop %v779
          %v788 = vmul.f32 1.0, %v787
          %v789 = vrcp.pop %v780
          %v790 = vmul.f32 1.0, %v789
          %v791 = vrcp.pop %v781
          %v792 = vmul.f32 1.0, %v791
          %v793 = vrcp.pop %v782
          %v794 = vmul.f32 1.0, %v793
          %v795 = vrcp.pop %v783
          %v796 = vmul.f32 1.0, %v795
          %v797 = vrcp.pop %v784
          %v798 = vmul.f32 1.0, %v797
          %v799 = vrcp.pop %v785
          %v800 = vmul.f32 1.0, %v799
          %v801 = vrcp.pop %v786
          %v802 = vmul.f32 1.0, %v801
          %v803 = vtanh.pop %v747
          %v804 = vtanh.pop %v748
          %v805 = vtanh.pop %v749
          %v806 = vtanh.pop %v750
          %v807 = vtanh.pop %v751
          %v808 = vtanh.pop %v752
          %v809 = vtanh.pop %v753
          %v810 = vtanh.pop %v754
          %v811 = vmul.f32 %v788, %v536
          %v812 = vmul.f32 %v790, %v537
          %v813 = vmul.f32 %v792, %v538
          %v814 = vmul.f32 %v794, %v539
          %v815 = vmul.f32 %v796, %v540
          %v816 = vmul.f32 %v798, %v541
          %v817 = vmul.f32 %v800, %v542
          %v818 = vmul.f32 %v802, %v543
          %827 = vrot.lane.b32.xlu0 %v803, 32
          %v828 = vpop.permute.xlu0 %827
          %829 = vrot.lane.b32.xlu0 %v804, 32
          %v830 = vpop.permute.xlu0 %829
          %831 = vrot.lane.b32.xlu0 %v805, 32
          %v832 = vpop.permute.xlu0 %831
          %833 = vrot.lane.b32.xlu0 %v806, 32
          %v834 = vpop.permute.xlu0 %833
          %835 = vrot.lane.b32.xlu0 %v807, 32
          %v836 = vpop.permute.xlu0 %835
          %837 = vrot.lane.b32.xlu0 %v808, 32
          %v838 = vpop.permute.xlu0 %837
          %839 = vrot.lane.b32.xlu0 %v809, 32
          %v840 = vpop.permute.xlu0 %839
          %841 = vrot.lane.b32.xlu0 %v810, 32
          %v842 = vpop.permute.xlu0 %841
          %v851 = vmul.f32 %v788, %v828
          %v852 = vmul.f32 %v790, %v830
          %v853 = vmul.f32 %v792, %v832
          %v854 = vmul.f32 %v794, %v834
          %v855 = vmul.f32 %v796, %v836
          %v856 = vmul.f32 %v798, %v838
          %v857 = vmul.f32 %v800, %v840
          %v858 = vmul.f32 %v802, %v842
          %867 = vrot.lane.b32.xlu0 %v851, 32
          %v868 = vpop.permute.xlu0 %867
          %869 = vrot.lane.b32.xlu0 %v852, 32
          %v870 = vpop.permute.xlu0 %869
          %871 = vrot.lane.b32.xlu0 %v853, 32
          %v872 = vpop.permute.xlu0 %871
          %873 = vrot.lane.b32.xlu0 %v854, 32
          %v874 = vpop.permute.xlu0 %873
          %875 = vrot.lane.b32.xlu0 %v855, 32
          %v876 = vpop.permute.xlu0 %875
          %877 = vrot.lane.b32.xlu0 %v856, 32
          %v878 = vpop.permute.xlu0 %877
          %879 = vrot.lane.b32.xlu0 %v857, 32
          %v880 = vpop.permute.xlu0 %879
          %881 = vrot.lane.b32.xlu0 %v858, 32
          %v882 = vpop.permute.xlu0 %881
          %v891 = vadd.f32 %v811, %v868
          %v892 = vadd.f32 %v812, %v870
          %v893 = vadd.f32 %v813, %v872
          %v894 = vadd.f32 %v814, %v874
          %v895 = vadd.f32 %v815, %v876
          %v896 = vadd.f32 %v816, %v878
          %v897 = vadd.f32 %v817, %v880
          %v898 = vadd.f32 %v818, %v882
          %v899 = vtanh.pop %v891
          %v900 = vtanh.pop %v892
          %v901 = vtanh.pop %v893
          %v902 = vtanh.pop %v894
          %v903 = vtanh.pop %v895
          %v904 = vtanh.pop %v896
          %v905 = vtanh.pop %v897
          %v906 = vtanh.pop %v898
          %915 = vrot.lane.b32.xlu0 %v899, 32
          %v916 = vpop.permute.xlu0 %915
          %917 = vrot.lane.b32.xlu0 %v900, 32
          %v918 = vpop.permute.xlu0 %917
          %919 = vrot.lane.b32.xlu0 %v901, 32
          %v920 = vpop.permute.xlu0 %919
          %921 = vrot.lane.b32.xlu0 %v902, 32
          %v922 = vpop.permute.xlu0 %921
          %923 = vrot.lane.b32.xlu0 %v903, 32
          %v924 = vpop.permute.xlu0 %923
          %925 = vrot.lane.b32.xlu0 %v904, 32
          %v926 = vpop.permute.xlu0 %925
          %927 = vrot.lane.b32.xlu0 %v905, 32
          %v928 = vpop.permute.xlu0 %927
          %929 = vrot.lane.b32.xlu0 %v906, 32
          %v930 = vpop.permute.xlu0 %929
          %v939 = vmul.f32 %v788, %v916
          %v940 = vmul.f32 %v790, %v918
          %v941 = vmul.f32 %v792, %v920
          %v942 = vmul.f32 %v794, %v922
          %v943 = vmul.f32 %v796, %v924
          %v944 = vmul.f32 %v798, %v926
          %v945 = vmul.f32 %v800, %v928
          %v946 = vmul.f32 %v802, %v930
          %s947 = sadd.s32 %s273, 640
          %s948 = scalar_lea.vmem %s221, %s947 [#allocation2]
          %v949 = vld [vmem:[%s948] sm:$0xff]
          %v950 = vld [vmem:[%s948 + $0x8] sm:$0xff]
          %v951 = vld [vmem:[%s948 + $0x10] sm:$0xff]
          %v952 = vld [vmem:[%s948 + $0x18] sm:$0xff]
          %v953 = vld [vmem:[%s948 + $0x20] sm:$0xff]
          %v954 = vld [vmem:[%s948 + $0x28] sm:$0xff]
          %v955 = vld [vmem:[%s948 + $0x30] sm:$0xff]
          %v956 = vld [vmem:[%s948 + $0x38] sm:$0xff]
          %965 = vrot.lane.b32.xlu0 %v939, 64
          %v966 = vpop.permute.xlu0 %965
          %967 = vrot.lane.b32.xlu0 %v940, 64
          %v968 = vpop.permute.xlu0 %967
          %969 = vrot.lane.b32.xlu0 %v941, 64
          %v970 = vpop.permute.xlu0 %969
          %971 = vrot.lane.b32.xlu0 %v942, 64
          %v972 = vpop.permute.xlu0 %971
          %973 = vrot.lane.b32.xlu0 %v943, 64
          %v974 = vpop.permute.xlu0 %973
          %975 = vrot.lane.b32.xlu0 %v944, 64
          %v976 = vpop.permute.xlu0 %975
          %977 = vrot.lane.b32.xlu0 %v945, 64
          %v978 = vpop.permute.xlu0 %977
          %979 = vrot.lane.b32.xlu0 %v946, 64
          %v980 = vpop.permute.xlu0 %979
          %v981 = vsel %vm283, %v966, 0
          %v983 = vsel %vm283, %v968, 0
          %v985 = vsel %vm283, %v970, 0
          %v987 = vsel %vm283, %v972, 0
          %v989 = vsel %vm283, %v974, 0
          %v991 = vsel %vm283, %v976, 0
          %v993 = vsel %vm283, %v978, 0
          %v995 = vsel %vm283, %v980, 0
          %997 = vmatprep.subr.mxu0 0.0
          %998 = vmatpush1.msra.mxu0 %v258
          %999 = vmatprep.subr.mxu0 0.0
          %1000 = vmatpush1.msra.mxu0 %v259
          %1001 = vmatprep.subr.mxu0 0.0
          %1002 = vmatpush1.msra.mxu0 %v260
          %1003 = vmatprep.subr.mxu0 0.0
          %1004 = vmatpush1.msra.mxu0 %v261
          %1005 = vmatprep.subr.mxu0 0.0
          %1006 = vmatpush1.msra.mxu0 0.0
          %1007 = vmatprep.subr.mxu0 0.0
          %1008 = vmatpush1.msra.mxu0 0.0
          %1009 = vmatprep.subr.mxu0 0.0
          %1010 = vmatpush1.msra.mxu0 0.0
          %1011 = vmatprep.subr.mxu0 0.0
          %1012 = vmatpush1.msra.mxu0 0.0
          %1013 = vmatprep.subr.mxu0 0.0
          %1014 = vmatpush1.msra.mxu0 0.0
          %1015 = vmatprep.subr.mxu0 0.0
          %1016 = vmatpush1.msra.mxu0 0.0
          %1017 = vmatprep.subr.mxu0 0.0
          %1018 = vmatpush1.msra.mxu0 0.0
          %1019 = vmatprep.subr.mxu0 0.0
          %1020 = vmatpush1.msra.mxu0 0.0
          %1021 = vmatprep.subr.mxu0 0.0
          %1022 = vmatpush1.msra.mxu0 0.0
          %1023 = vmatprep.subr.mxu0 0.0
          %1024 = vmatpush1.msra.mxu0 0.0
          %1025 = vmatprep.subr.mxu0 0.0
          %1026 = vmatpush1.msra.mxu0 0.0
          %1027 = vmatprep.subr.mxu0 0.0
          %1028 = vmatpush1.msra.mxu0 0.0
          %1029 = vmatprep.subr.mxu0 0.0
          %1030 = vmatpush1.msra.mxu0 0.0
          %1031 = vmatprep.subr.mxu0 0.0
          %1032 = vmatpush1.msra.mxu0 0.0
          %1033 = vmatprep.subr.mxu0 0.0
          %1034 = vmatpush1.msra.mxu0 0.0
          %1035 = vmatprep.subr.mxu0 0.0
          %1036 = vmatpush1.msra.mxu0 0.0
          %1037 = vmatprep.subr.mxu0 0.0
          %1038 = vmatpush1.msra.mxu0 0.0
          %1039 = vmatprep.subr.mxu0 0.0
          %1040 = vmatpush1.msra.mxu0 0.0
          %1041 = vmatprep.subr.mxu0 0.0
          %1042 = vmatpush1.msra.mxu0 0.0
          %1043 = vmatprep.subr.mxu0 0.0
          %1044 = vmatpush1.msra.mxu0 0.0
          %1045 = vmatprep.subr.mxu0 0.0
          %1046 = vmatpush1.msra.mxu0 0.0
          %1047 = vmatprep.subr.mxu0 0.0
          %1048 = vmatpush1.msra.mxu0 0.0
          %1049 = vmatprep.subr.mxu0 0.0
          %1050 = vmatpush1.msra.mxu0 0.0
          %1051 = vmatprep.subr.mxu0 0.0
          %1052 = vmatpush1.msra.mxu0 0.0
          %1053 = vmatprep.subr.mxu0 0.0
          %1054 = vmatpush1.msra.mxu0 0.0
          %1055 = vmatprep.subr.mxu0 0.0
          %1056 = vmatpush1.msra.mxu0 0.0
          %1057 = vmatprep.subr.mxu0 0.0
          %1058 = vmatpush1.msra.mxu0 0.0
          %1059 = vmatprep.subr.mxu0 0.0
          %1060 = vmatpush1.msra.mxu0 0.0
          %1061 = vmatprep.mubr.f32.mxu0 0.0
          %1062 = vmatmul.mubr.f32.gmra.mrb[0].mxu0 %v981
          %v1063 = vpop.f32.mrb[0].mxu0
          %v1064 = vadd.f32 0.0, %v1063
          %v1065 = vpop.f32.mrb[0].mxu0
          %1066 = vmatprep.mubr.f32.mxu0 0.0
          %1067 = vmatmul.mubr.f32.gmra.mrb[0].mxu0 %v983
          %v1068 = vpop.f32.mrb[0].mxu0
          %v1069 = vadd.f32 0.0, %v1068
          %v1070 = vpop.f32.mrb[0].mxu0
          %1071 = vmatprep.mubr.f32.mxu0 0.0
          %1072 = vmatmul.mubr.f32.gmra.mrb[0].mxu0 %v985
          %v1073 = vpop.f32.mrb[0].mxu0
          %v1074 = vadd.f32 0.0, %v1073
          %v1075 = vpop.f32.mrb[0].mxu0
          %1076 = vmatprep.mubr.f32.mxu0 0.0
          %1077 = vmatmul.mubr.f32.gmra.mrb[0].mxu0 %v987
          %v1078 = vpop.f32.mrb[0].mxu0
          %v1079 = vadd.f32 0.0, %v1078
          %v1080 = vpop.f32.mrb[0].mxu0
          %1081 = vmatprep.mubr.f32.mxu0 0.0
          %1082 = vmatmul.mubr.f32.gmra.mrb[0].mxu0 %v989
          %v1083 = vpop.f32.mrb[0].mxu0
          %v1084 = vadd.f32 0.0, %v1083
          %v1085 = vpop.f32.mrb[0].mxu0
          %1086 = vmatprep.mubr.f32.mxu0 0.0
          %1087 = vmatmul.mubr.f32.gmra.mrb[0].mxu0 %v991
          %v1088 = vpop.f32.mrb[0].mxu0
          %v1089 = vadd.f32 0.0, %v1088
          %v1090 = vpop.f32.mrb[0].mxu0
          %1091 = vmatprep.mubr.f32.mxu0 0.0
          %1092 = vmatmul.mubr.f32.gmra.mrb[0].mxu0 %v993
          %v1093 = vpop.f32.mrb[0].mxu0
          %v1094 = vadd.f32 0.0, %v1093
          %v1095 = vpop.f32.mrb[0].mxu0
          %1096 = vmatprep.mubr.f32.mxu0 0.0
          %1097 = vmatmul.mubr.f32.gmra.mrb[0].mxu0 %v995
          %v1098 = vpop.f32.mrb[0].mxu0
          %v1099 = vadd.f32 0.0, %v1098
          %v1100 = vpop.f32.mrb[0].mxu0
          %1101 = vdwg.mxu0
          %v1102 = vadd.f32 %v949, %v1064
          %v1103 = vadd.f32 %v950, %v1069
          %v1104 = vadd.f32 %v951, %v1074
          %v1105 = vadd.f32 %v952, %v1079
          %v1106 = vadd.f32 %v953, %v1084
          %v1107 = vadd.f32 %v954, %v1089
          %v1108 = vadd.f32 %v955, %v1094
          %v1109 = vadd.f32 %v956, %v1099
          %v1110 = vxor.u32 %v1102, 2147483648
          %v1111 = vxor.u32 %v1103, 2147483648
          %v1112 = vxor.u32 %v1104, 2147483648
          %v1113 = vxor.u32 %v1105, 2147483648
          %v1114 = vxor.u32 %v1106, 2147483648
          %v1115 = vxor.u32 %v1107, 2147483648
          %v1116 = vxor.u32 %v1108, 2147483648
          %v1117 = vxor.u32 %v1109, 2147483648
          %v1118 = vmul.f32 %v1110, 1.442695
          %v1119 = vpow.pop %v1118
          %v1120 = vmul.f32 %v1111, 1.442695
          %v1121 = vpow.pop %v1120
          %v1122 = vmul.f32 %v1112, 1.442695
          %v1123 = vpow.pop %v1122
          %v1124 = vmul.f32 %v1113, 1.442695
          %v1125 = vpow.pop %v1124
          %v1126 = vmul.f32 %v1114, 1.442695
          %v1127 = vpow.pop %v1126
          %v1128 = vmul.f32 %v1115, 1.442695
          %v1129 = vpow.pop %v1128
          %v1130 = vmul.f32 %v1116, 1.442695
          %v1131 = vpow.pop %v1130
          %v1132 = vmul.f32 %v1117, 1.442695
          %v1133 = vpow.pop %v1132
          %v1134 = vadd.f32 %v1119, 1.0
          %v1135 = vadd.f32 %v1121, 1.0
          %v1136 = vadd.f32 %v1123, 1.0
          %v1137 = vadd.f32 %v1125, 1.0
          %v1138 = vadd.f32 %v1127, 1.0
          %v1139 = vadd.f32 %v1129, 1.0
          %v1140 = vadd.f32 %v1131, 1.0
          %v1141 = vadd.f32 %v1133, 1.0
          %v1142 = vrcp.pop %v1134
          %v1143 = vmul.f32 1.0, %v1142
          %v1144 = vrcp.pop %v1135
          %v1145 = vmul.f32 1.0, %v1144
          %v1146 = vrcp.pop %v1136
          %v1147 = vmul.f32 1.0, %v1146
          %v1148 = vrcp.pop %v1137
          %v1149 = vmul.f32 1.0, %v1148
          %v1150 = vrcp.pop %v1138
          %v1151 = vmul.f32 1.0, %v1150
          %v1152 = vrcp.pop %v1139
          %v1153 = vmul.f32 1.0, %v1152
          %v1154 = vrcp.pop %v1140
          %v1155 = vmul.f32 1.0, %v1154
          %v1156 = vrcp.pop %v1141
          %v1157 = vmul.f32 1.0, %v1156
          %v1158 = vtanh.pop %v1102
          %v1159 = vtanh.pop %v1103
          %v1160 = vtanh.pop %v1104
          %v1161 = vtanh.pop %v1105
          %v1162 = vtanh.pop %v1106
          %v1163 = vtanh.pop %v1107
          %v1164 = vtanh.pop %v1108
          %v1165 = vtanh.pop %v1109
          %v1166 = vmul.f32 %v1143, %v891
          %v1167 = vmul.f32 %v1145, %v892
          %v1168 = vmul.f32 %v1147, %v893
          %v1169 = vmul.f32 %v1149, %v894
          %v1170 = vmul.f32 %v1151, %v895
          %v1171 = vmul.f32 %v1153, %v896
          %v1172 = vmul.f32 %v1155, %v897
          %v1173 = vmul.f32 %v1157, %v898
          %1182 = vrot.lane.b32.xlu0 %v1158, 32
          %v1183 = vpop.permute.xlu0 %1182
          %1184 = vrot.lane.b32.xlu0 %v1159, 32
          %v1185 = vpop.permute.xlu0 %1184
          %1186 = vrot.lane.b32.xlu0 %v1160, 32
          %v1187 = vpop.permute.xlu0 %1186
          %1188 = vrot.lane.b32.xlu0 %v1161, 32
          %v1189 = vpop.permute.xlu0 %1188
          %1190 = vrot.lane.b32.xlu0 %v1162, 32
          %v1191 = vpop.permute.xlu0 %1190
          %1192 = vrot.lane.b32.xlu0 %v1163, 32
          %v1193 = vpop.permute.xlu0 %1192
          %1194 = vrot.lane.b32.xlu0 %v1164, 32
          %v1195 = vpop.permute.xlu0 %1194
          %1196 = vrot.lane.b32.xlu0 %v1165, 32
          %v1197 = vpop.permute.xlu0 %1196
          %v1206 = vmul.f32 %v1143, %v1183
          %v1207 = vmul.f32 %v1145, %v1185
          %v1208 = vmul.f32 %v1147, %v1187
          %v1209 = vmul.f32 %v1149, %v1189
          %v1210 = vmul.f32 %v1151, %v1191
          %v1211 = vmul.f32 %v1153, %v1193
          %v1212 = vmul.f32 %v1155, %v1195
          %v1213 = vmul.f32 %v1157, %v1197
          %1222 = vrot.lane.b32.xlu0 %v1206, 32
          %v1223 = vpop.permute.xlu0 %1222
          %1224 = vrot.lane.b32.xlu0 %v1207, 32
          %v1225 = vpop.permute.xlu0 %1224
          %1226 = vrot.lane.b32.xlu0 %v1208, 32
          %v1227 = vpop.permute.xlu0 %1226
          %1228 = vrot.lane.b32.xlu0 %v1209, 32
          %v1229 = vpop.permute.xlu0 %1228
          %1230 = vrot.lane.b32.xlu0 %v1210, 32
          %v1231 = vpop.permute.xlu0 %1230
          %1232 = vrot.lane.b32.xlu0 %v1211, 32
          %v1233 = vpop.permute.xlu0 %1232
          %1234 = vrot.lane.b32.xlu0 %v1212, 32
          %v1235 = vpop.permute.xlu0 %1234
          %1236 = vrot.lane.b32.xlu0 %v1213, 32
          %v1237 = vpop.permute.xlu0 %1236
          %v1246 = vadd.f32 %v1166, %v1223
          %v1247 = vadd.f32 %v1167, %v1225
          %v1248 = vadd.f32 %v1168, %v1227
          %v1249 = vadd.f32 %v1169, %v1229
          %v1250 = vadd.f32 %v1170, %v1231
          %v1251 = vadd.f32 %v1171, %v1233
          %v1252 = vadd.f32 %v1172, %v1235
          %v1253 = vadd.f32 %v1173, %v1237
          %v1254 = vtanh.pop %v1246
          %v1255 = vtanh.pop %v1247
          %v1256 = vtanh.pop %v1248
          %v1257 = vtanh.pop %v1249
          %v1258 = vtanh.pop %v1250
          %v1259 = vtanh.pop %v1251
          %v1260 = vtanh.pop %v1252
          %v1261 = vtanh.pop %v1253
          %1270 = vrot.lane.b32.xlu0 %v1254, 32
          %v1271 = vpop.permute.xlu0 %1270
          %1272 = vrot.lane.b32.xlu0 %v1255, 32
          %v1273 = vpop.permute.xlu0 %1272
          %1274 = vrot.lane.b32.xlu0 %v1256, 32
          %v1275 = vpop.permute.xlu0 %1274
          %1276 = vrot.lane.b32.xlu0 %v1257, 32
          %v1277 = vpop.permute.xlu0 %1276
          %1278 = vrot.lane.b32.xlu0 %v1258, 32
          %v1279 = vpop.permute.xlu0 %1278
          %1280 = vrot.lane.b32.xlu0 %v1259, 32
          %v1281 = vpop.permute.xlu0 %1280
          %1282 = vrot.lane.b32.xlu0 %v1260, 32
          %v1283 = vpop.permute.xlu0 %1282
          %1284 = vrot.lane.b32.xlu0 %v1261, 32
          %v1285 = vpop.permute.xlu0 %1284
          %v1294 = vmul.f32 %v1143, %v1271
          %v1295 = vmul.f32 %v1145, %v1273
          %v1296 = vmul.f32 %v1147, %v1275
          %v1297 = vmul.f32 %v1149, %v1277
          %v1298 = vmul.f32 %v1151, %v1279
          %v1299 = vmul.f32 %v1153, %v1281
          %v1300 = vmul.f32 %v1155, %v1283
          %v1301 = vmul.f32 %v1157, %v1285
          %s1302 = sadd.s32 %s273, 960
          %s1303 = scalar_lea.vmem %s221, %s1302 [#allocation2]
          %v1304 = vld [vmem:[%s1303] sm:$0xff]
          %v1305 = vld [vmem:[%s1303 + $0x8] sm:$0xff]
          %v1306 = vld [vmem:[%s1303 + $0x10] sm:$0xff]
          %v1307 = vld [vmem:[%s1303 + $0x18] sm:$0xff]
          %v1308 = vld [vmem:[%s1303 + $0x20] sm:$0xff]
          %v1309 = vld [vmem:[%s1303 + $0x28] sm:$0xff]
          %v1310 = vld [vmem:[%s1303 + $0x30] sm:$0xff]
          %v1311 = vld [vmem:[%s1303 + $0x38] sm:$0xff]
          %1320 = vrot.lane.b32.xlu0 %v1294, 64
          %v1321 = vpop.permute.xlu0 %1320
          %1322 = vrot.lane.b32.xlu0 %v1295, 64
          %v1323 = vpop.permute.xlu0 %1322
          %1324 = vrot.lane.b32.xlu0 %v1296, 64
          %v1325 = vpop.permute.xlu0 %1324
          %1326 = vrot.lane.b32.xlu0 %v1297, 64
          %v1327 = vpop.permute.xlu0 %1326
          %1328 = vrot.lane.b32.xlu0 %v1298, 64
          %v1329 = vpop.permute.xlu0 %1328
          %1330 = vrot.lane.b32.xlu0 %v1299, 64
          %v1331 = vpop.permute.xlu0 %1330
          %1332 = vrot.lane.b32.xlu0 %v1300, 64
          %v1333 = vpop.permute.xlu0 %1332
          %1334 = vrot.lane.b32.xlu0 %v1301, 64
          %v1335 = vpop.permute.xlu0 %1334
          %v1336 = vsel %vm283, %v1321, 0
          %v1338 = vsel %vm283, %v1323, 0
          %v1340 = vsel %vm283, %v1325, 0
          %v1342 = vsel %vm283, %v1327, 0
          %v1344 = vsel %vm283, %v1329, 0
          %v1346 = vsel %vm283, %v1331, 0
          %v1348 = vsel %vm283, %v1333, 0
          %v1350 = vsel %vm283, %v1335, 0
          %1352 = vmatprep.subr.mxu0 0.0
          %1353 = vmatpush1.msra.mxu0 %v258
          %1354 = vmatprep.subr.mxu0 0.0
          %1355 = vmatpush1.msra.mxu0 %v259
          %1356 = vmatprep.subr.mxu0 0.0
          %1357 = vmatpush1.msra.mxu0 %v260
          %1358 = vmatprep.subr.mxu0 0.0
          %1359 = vmatpush1.msra.mxu0 %v261
          %1360 = vmatprep.subr.mxu0 0.0
          %1361 = vmatpush1.msra.mxu0 0.0
          %1362 = vmatprep.subr.mxu0 0.0
          %1363 = vmatpush1.msra.mxu0 0.0
          %1364 = vmatprep.subr.mxu0 0.0
          %1365 = vmatpush1.msra.mxu0 0.0
          %1366 = vmatprep.subr.mxu0 0.0
          %1367 = vmatpush1.msra.mxu0 0.0
          %1368 = vmatprep.subr.mxu0 0.0
          %1369 = vmatpush1.msra.mxu0 0.0
          %1370 = vmatprep.subr.mxu0 0.0
          %1371 = vmatpush1.msra.mxu0 0.0
          %1372 = vmatprep.subr.mxu0 0.0
          %1373 = vmatpush1.msra.mxu0 0.0
          %1374 = vmatprep.subr.mxu0 0.0
          %1375 = vmatpush1.msra.mxu0 0.0
          %1376 = vmatprep.subr.mxu0 0.0
          %1377 = vmatpush1.msra.mxu0 0.0
          %1378 = vmatprep.subr.mxu0 0.0
          %1379 = vmatpush1.msra.mxu0 0.0
          %1380 = vmatprep.subr.mxu0 0.0
          %1381 = vmatpush1.msra.mxu0 0.0
          %1382 = vmatprep.subr.mxu0 0.0
          %1383 = vmatpush1.msra.mxu0 0.0
          %1384 = vmatprep.subr.mxu0 0.0
          %1385 = vmatpush1.msra.mxu0 0.0
          %1386 = vmatprep.subr.mxu0 0.0
          %1387 = vmatpush1.msra.mxu0 0.0
          %1388 = vmatprep.subr.mxu0 0.0
          %1389 = vmatpush1.msra.mxu0 0.0
          %1390 = vmatprep.subr.mxu0 0.0
          %1391 = vmatpush1.msra.mxu0 0.0
          %1392 = vmatprep.subr.mxu0 0.0
          %1393 = vmatpush1.msra.mxu0 0.0
          %1394 = vmatprep.subr.mxu0 0.0
          %1395 = vmatpush1.msra.mxu0 0.0
          %1396 = vmatprep.subr.mxu0 0.0
          %1397 = vmatpush1.msra.mxu0 0.0
          %1398 = vmatprep.subr.mxu0 0.0
          %1399 = vmatpush1.msra.mxu0 0.0
          %1400 = vmatprep.subr.mxu0 0.0
          %1401 = vmatpush1.msra.mxu0 0.0
          %1402 = vmatprep.subr.mxu0 0.0
          %1403 = vmatpush1.msra.mxu0 0.0
          %1404 = vmatprep.subr.mxu0 0.0
          %1405 = vmatpush1.msra.mxu0 0.0
          %1406 = vmatprep.subr.mxu0 0.0
          %1407 = vmatpush1.msra.mxu0 0.0
          %1408 = vmatprep.subr.mxu0 0.0
          %1409 = vmatpush1.msra.mxu0 0.0
          %1410 = vmatprep.subr.mxu0 0.0
          %1411 = vmatpush1.msra.mxu0 0.0
          %1412 = vmatprep.subr.mxu0 0.0
          %1413 = vmatpush1.msra.mxu0 0.0
          %1414 = vmatprep.subr.mxu0 0.0
          %1415 = vmatpush1.msra.mxu0 0.0
          %1416 = vmatprep.mubr.f32.mxu0 0.0
          %1417 = vmatmul.mubr.f32.gmra.mrb[0].mxu0 %v1336
          %v1418 = vpop.f32.mrb[0].mxu0
          %v1419 = vadd.f32 0.0, %v1418
          %v1420 = vpop.f32.mrb[0].mxu0
          %1421 = vmatprep.mubr.f32.mxu0 0.0
          %1422 = vmatmul.mubr.f32.gmra.mrb[0].mxu0 %v1338
          %v1423 = vpop.f32.mrb[0].mxu0
          %v1424 = vadd.f32 0.0, %v1423
          %v1425 = vpop.f32.mrb[0].mxu0
          %1426 = vmatprep.mubr.f32.mxu0 0.0
          %1427 = vmatmul.mubr.f32.gmra.mrb[0].mxu0 %v1340
          %v1428 = vpop.f32.mrb[0].mxu0
          %v1429 = vadd.f32 0.0, %v1428
          %v1430 = vpop.f32.mrb[0].mxu0
          %1431 = vmatprep.mubr.f32.mxu0 0.0
          %1432 = vmatmul.mubr.f32.gmra.mrb[0].mxu0 %v1342
          %v1433 = vpop.f32.mrb[0].mxu0
          %v1434 = vadd.f32 0.0, %v1433
          %v1435 = vpop.f32.mrb[0].mxu0
          %1436 = vmatprep.mubr.f32.mxu0 0.0
          %1437 = vmatmul.mubr.f32.gmra.mrb[0].mxu0 %v1344
          %v1438 = vpop.f32.mrb[0].mxu0
          %v1439 = vadd.f32 0.0, %v1438
          %v1440 = vpop.f32.mrb[0].mxu0
          %1441 = vmatprep.mubr.f32.mxu0 0.0
          %1442 = vmatmul.mubr.f32.gmra.mrb[0].mxu0 %v1346
          %v1443 = vpop.f32.mrb[0].mxu0
          %v1444 = vadd.f32 0.0, %v1443
          %v1445 = vpop.f32.mrb[0].mxu0
          %1446 = vmatprep.mubr.f32.mxu0 0.0
          %1447 = vmatmul.mubr.f32.gmra.mrb[0].mxu0 %v1348
          %v1448 = vpop.f32.mrb[0].mxu0
          %v1449 = vadd.f32 0.0, %v1448
          %v1450 = vpop.f32.mrb[0].mxu0
          %1451 = vmatprep.mubr.f32.mxu0 0.0
          %1452 = vmatmul.mubr.f32.gmra.mrb[0].mxu0 %v1350
          %v1453 = vpop.f32.mrb[0].mxu0
          %v1454 = vadd.f32 0.0, %v1453
          %v1455 = vpop.f32.mrb[0].mxu0
          %1456 = vdwg.mxu0
          %v1457 = vadd.f32 %v1304, %v1419
          %v1458 = vadd.f32 %v1305, %v1424
          %v1459 = vadd.f32 %v1306, %v1429
          %v1460 = vadd.f32 %v1307, %v1434
          %v1461 = vadd.f32 %v1308, %v1439
          %v1462 = vadd.f32 %v1309, %v1444
          %v1463 = vadd.f32 %v1310, %v1449
          %v1464 = vadd.f32 %v1311, %v1454
          %v1465 = vxor.u32 %v1457, 2147483648
          %v1466 = vxor.u32 %v1458, 2147483648
          %v1467 = vxor.u32 %v1459, 2147483648
          %v1468 = vxor.u32 %v1460, 2147483648
          %v1469 = vxor.u32 %v1461, 2147483648
          %v1470 = vxor.u32 %v1462, 2147483648
          %v1471 = vxor.u32 %v1463, 2147483648
          %v1472 = vxor.u32 %v1464, 2147483648
          %v1473 = vmul.f32 %v1465, 1.442695
          %v1474 = vpow.pop %v1473
          %v1475 = vmul.f32 %v1466, 1.442695
          %v1476 = vpow.pop %v1475
          %v1477 = vmul.f32 %v1467, 1.442695
          %v1478 = vpow.pop %v1477
          %v1479 = vmul.f32 %v1468, 1.442695
          %v1480 = vpow.pop %v1479
          %v1481 = vmul.f32 %v1469, 1.442695
          %v1482 = vpow.pop %v1481
          %v1483 = vmul.f32 %v1470, 1.442695
          %v1484 = vpow.pop %v1483
          %v1485 = vmul.f32 %v1471, 1.442695
          %v1486 = vpow.pop %v1485
          %v1487 = vmul.f32 %v1472, 1.442695
          %v1488 = vpow.pop %v1487
          %v1489 = vadd.f32 %v1474, 1.0
          %v1490 = vadd.f32 %v1476, 1.0
          %v1491 = vadd.f32 %v1478, 1.0
          %v1492 = vadd.f32 %v1480, 1.0
          %v1493 = vadd.f32 %v1482, 1.0
          %v1494 = vadd.f32 %v1484, 1.0
          %v1495 = vadd.f32 %v1486, 1.0
          %v1496 = vadd.f32 %v1488, 1.0
          %v1497 = vrcp.pop %v1489
          %v1498 = vmul.f32 1.0, %v1497
          %v1499 = vrcp.pop %v1490
          %v1500 = vmul.f32 1.0, %v1499
          %v1501 = vrcp.pop %v1491
          %v1502 = vmul.f32 1.0, %v1501
          %v1503 = vrcp.pop %v1492
          %v1504 = vmul.f32 1.0, %v1503
          %v1505 = vrcp.pop %v1493
          %v1506 = vmul.f32 1.0, %v1505
          %v1507 = vrcp.pop %v1494
          %v1508 = vmul.f32 1.0, %v1507
          %v1509 = vrcp.pop %v1495
          %v1510 = vmul.f32 1.0, %v1509
          %v1511 = vrcp.pop %v1496
          %v1512 = vmul.f32 1.0, %v1511
          %v1513 = vtanh.pop %v1457
          %v1514 = vtanh.pop %v1458
          %v1515 = vtanh.pop %v1459
          %v1516 = vtanh.pop %v1460
          %v1517 = vtanh.pop %v1461
          %v1518 = vtanh.pop %v1462
          %v1519 = vtanh.pop %v1463
          %v1520 = vtanh.pop %v1464
          %v1521 = vmul.f32 %v1498, %v1246
          %v1522 = vmul.f32 %v1500, %v1247
          %v1523 = vmul.f32 %v1502, %v1248
          %v1524 = vmul.f32 %v1504, %v1249
          %v1525 = vmul.f32 %v1506, %v1250
          %v1526 = vmul.f32 %v1508, %v1251
          %v1527 = vmul.f32 %v1510, %v1252
          %v1528 = vmul.f32 %v1512, %v1253
          %1537 = vrot.lane.b32.xlu0 %v1513, 32
          %v1538 = vpop.permute.xlu0 %1537
          %1539 = vrot.lane.b32.xlu0 %v1514, 32
          %v1540 = vpop.permute.xlu0 %1539
          %1541 = vrot.lane.b32.xlu0 %v1515, 32
          %v1542 = vpop.permute.xlu0 %1541
          %1543 = vrot.lane.b32.xlu0 %v1516, 32
          %v1544 = vpop.permute.xlu0 %1543
          %1545 = vrot.lane.b32.xlu0 %v1517, 32
          %v1546 = vpop.permute.xlu0 %1545
          %1547 = vrot.lane.b32.xlu0 %v1518, 32
          %v1548 = vpop.permute.xlu0 %1547
          %1549 = vrot.lane.b32.xlu0 %v1519, 32
          %v1550 = vpop.permute.xlu0 %1549
          %1551 = vrot.lane.b32.xlu0 %v1520, 32
          %v1552 = vpop.permute.xlu0 %1551
          %v1561 = vmul.f32 %v1498, %v1538
          %v1562 = vmul.f32 %v1500, %v1540
          %v1563 = vmul.f32 %v1502, %v1542
          %v1564 = vmul.f32 %v1504, %v1544
          %v1565 = vmul.f32 %v1506, %v1546
          %v1566 = vmul.f32 %v1508, %v1548
          %v1567 = vmul.f32 %v1510, %v1550
          %v1568 = vmul.f32 %v1512, %v1552
          %1577 = vrot.lane.b32.xlu0 %v1561, 32
          %v1578 = vpop.permute.xlu0 %1577
          %1579 = vrot.lane.b32.xlu0 %v1562, 32
          %v1580 = vpop.permute.xlu0 %1579
          %1581 = vrot.lane.b32.xlu0 %v1563, 32
          %v1582 = vpop.permute.xlu0 %1581
          %1583 = vrot.lane.b32.xlu0 %v1564, 32
          %v1584 = vpop.permute.xlu0 %1583
          %1585 = vrot.lane.b32.xlu0 %v1565, 32
          %v1586 = vpop.permute.xlu0 %1585
          %1587 = vrot.lane.b32.xlu0 %v1566, 32
          %v1588 = vpop.permute.xlu0 %1587
          %1589 = vrot.lane.b32.xlu0 %v1567, 32
          %v1590 = vpop.permute.xlu0 %1589
          %1591 = vrot.lane.b32.xlu0 %v1568, 32
          %v1592 = vpop.permute.xlu0 %1591
          %v1601 = vadd.f32 %v1521, %v1578
          %v1602 = vadd.f32 %v1522, %v1580
          %v1603 = vadd.f32 %v1523, %v1582
          %v1604 = vadd.f32 %v1524, %v1584
          %v1605 = vadd.f32 %v1525, %v1586
          %v1606 = vadd.f32 %v1526, %v1588
          %v1607 = vadd.f32 %v1527, %v1590
          %v1608 = vadd.f32 %v1528, %v1592
          %v1609 = vtanh.pop %v1601
          %v1610 = vtanh.pop %v1602
          %v1611 = vtanh.pop %v1603
          %v1612 = vtanh.pop %v1604
          %v1613 = vtanh.pop %v1605
          %v1614 = vtanh.pop %v1606
          %v1615 = vtanh.pop %v1607
          %v1616 = vtanh.pop %v1608
          %1625 = vrot.lane.b32.xlu0 %v1609, 32
          %v1626 = vpop.permute.xlu0 %1625
          %1627 = vrot.lane.b32.xlu0 %v1610, 32
          %v1628 = vpop.permute.xlu0 %1627
          %1629 = vrot.lane.b32.xlu0 %v1611, 32
          %v1630 = vpop.permute.xlu0 %1629
          %1631 = vrot.lane.b32.xlu0 %v1612, 32
          %v1632 = vpop.permute.xlu0 %1631
          %1633 = vrot.lane.b32.xlu0 %v1613, 32
          %v1634 = vpop.permute.xlu0 %1633
          %1635 = vrot.lane.b32.xlu0 %v1614, 32
          %v1636 = vpop.permute.xlu0 %1635
          %1637 = vrot.lane.b32.xlu0 %v1615, 32
          %v1638 = vpop.permute.xlu0 %1637
          %1639 = vrot.lane.b32.xlu0 %v1616, 32
          %v1640 = vpop.permute.xlu0 %1639
          %v1649 = vmul.f32 %v1498, %v1626
          %v1650 = vmul.f32 %v1500, %v1628
          %v1651 = vmul.f32 %v1502, %v1630
          %v1652 = vmul.f32 %v1504, %v1632
          %v1653 = vmul.f32 %v1506, %v1634
          %v1654 = vmul.f32 %v1508, %v1636
          %v1655 = vmul.f32 %v1510, %v1638
          %v1656 = vmul.f32 %v1512, %v1640
          %s1657 = sadd.s32 %s273, 1280
          %s1658 = scalar_lea.vmem %s221, %s1657 [#allocation2]
          %v1659 = vld [vmem:[%s1658] sm:$0xff]
          %v1660 = vld [vmem:[%s1658 + $0x8] sm:$0xff]
          %v1661 = vld [vmem:[%s1658 + $0x10] sm:$0xff]
          %v1662 = vld [vmem:[%s1658 + $0x18] sm:$0xff]
          %v1663 = vld [vmem:[%s1658 + $0x20] sm:$0xff]
          %v1664 = vld [vmem:[%s1658 + $0x28] sm:$0xff]
          %v1665 = vld [vmem:[%s1658 + $0x30] sm:$0xff]
          %v1666 = vld [vmem:[%s1658 + $0x38] sm:$0xff]
          %1675 = vrot.lane.b32.xlu0 %v1649, 64
          %v1676 = vpop.permute.xlu0 %1675
          %1677 = vrot.lane.b32.xlu0 %v1650, 64
          %v1678 = vpop.permute.xlu0 %1677
          %1679 = vrot.lane.b32.xlu0 %v1651, 64
          %v1680 = vpop.permute.xlu0 %1679
          %1681 = vrot.lane.b32.xlu0 %v1652, 64
          %v1682 = vpop.permute.xlu0 %1681
          %1683 = vrot.lane.b32.xlu0 %v1653, 64
          %v1684 = vpop.permute.xlu0 %1683
          %1685 = vrot.lane.b32.xlu0 %v1654, 64
          %v1686 = vpop.permute.xlu0 %1685
          %1687 = vrot.lane.b32.xlu0 %v1655, 64
          %v1688 = vpop.permute.xlu0 %1687
          %1689 = vrot.lane.b32.xlu0 %v1656, 64
          %v1690 = vpop.permute.xlu0 %1689
          %v1691 = vsel %vm283, %v1676, 0
          %v1693 = vsel %vm283, %v1678, 0
          %v1695 = vsel %vm283, %v1680, 0
          %v1697 = vsel %vm283, %v1682, 0
          %v1699 = vsel %vm283, %v1684, 0
          %v1701 = vsel %vm283, %v1686, 0
          %v1703 = vsel %vm283, %v1688, 0
          %v1705 = vsel %vm283, %v1690, 0
          %1707 = vmatprep.subr.mxu0 0.0
          %1708 = vmatpush1.msra.mxu0 %v258
          %1709 = vmatprep.subr.mxu0 0.0
          %1710 = vmatpush1.msra.mxu0 %v259
          %1711 = vmatprep.subr.mxu0 0.0
          %1712 = vmatpush1.msra.mxu0 %v260
          %1713 = vmatprep.subr.mxu0 0.0
          %1714 = vmatpush1.msra.mxu0 %v261
          %1715 = vmatprep.subr.mxu0 0.0
          %1716 = vmatpush1.msra.mxu0 0.0
          %1717 = vmatprep.subr.mxu0 0.0
          %1718 = vmatpush1.msra.mxu0 0.0
          %1719 = vmatprep.subr.mxu0 0.0
          %1720 = vmatpush1.msra.mxu0 0.0
          %1721 = vmatprep.subr.mxu0 0.0
          %1722 = vmatpush1.msra.mxu0 0.0
          %1723 = vmatprep.subr.mxu0 0.0
          %1724 = vmatpush1.msra.mxu0 0.0
          %1725 = vmatprep.subr.mxu0 0.0
          %1726 = vmatpush1.msra.mxu0 0.0
          %1727 = vmatprep.subr.mxu0 0.0
          %1728 = vmatpush1.msra.mxu0 0.0
          %1729 = vmatprep.subr.mxu0 0.0
          %1730 = vmatpush1.msra.mxu0 0.0
          %1731 = vmatprep.subr.mxu0 0.0
          %1732 = vmatpush1.msra.mxu0 0.0
          %1733 = vmatprep.subr.mxu0 0.0
          %1734 = vmatpush1.msra.mxu0 0.0
          %1735 = vmatprep.subr.mxu0 0.0
          %1736 = vmatpush1.msra.mxu0 0.0
          %1737 = vmatprep.subr.mxu0 0.0
          %1738 = vmatpush1.msra.mxu0 0.0
          %1739 = vmatprep.subr.mxu0 0.0
          %1740 = vmatpush1.msra.mxu0 0.0
          %1741 = vmatprep.subr.mxu0 0.0
          %1742 = vmatpush1.msra.mxu0 0.0
          %1743 = vmatprep.subr.mxu0 0.0
          %1744 = vmatpush1.msra.mxu0 0.0
          %1745 = vmatprep.subr.mxu0 0.0
          %1746 = vmatpush1.msra.mxu0 0.0
          %1747 = vmatprep.subr.mxu0 0.0
          %1748 = vmatpush1.msra.mxu0 0.0
          %1749 = vmatprep.subr.mxu0 0.0
          %1750 = vmatpush1.msra.mxu0 0.0
          %1751 = vmatprep.subr.mxu0 0.0
          %1752 = vmatpush1.msra.mxu0 0.0
          %1753 = vmatprep.subr.mxu0 0.0
          %1754 = vmatpush1.msra.mxu0 0.0
          %1755 = vmatprep.subr.mxu0 0.0
          %1756 = vmatpush1.msra.mxu0 0.0
          %1757 = vmatprep.subr.mxu0 0.0
          %1758 = vmatpush1.msra.mxu0 0.0
          %1759 = vmatprep.subr.mxu0 0.0
          %1760 = vmatpush1.msra.mxu0 0.0
          %1761 = vmatprep.subr.mxu0 0.0
          %1762 = vmatpush1.msra.mxu0 0.0
          %1763 = vmatprep.subr.mxu0 0.0
          %1764 = vmatpush1.msra.mxu0 0.0
          %1765 = vmatprep.subr.mxu0 0.0
          %1766 = vmatpush1.msra.mxu0 0.0
          %1767 = vmatprep.subr.mxu0 0.0
          %1768 = vmatpush1.msra.mxu0 0.0
          %1769 = vmatprep.subr.mxu0 0.0
          %1770 = vmatpush1.msra.mxu0 0.0
          %1771 = vmatprep.mubr.f32.mxu0 0.0
          %1772 = vmatmul.mubr.f32.gmra.mrb[0].mxu0 %v1691
          %v1773 = vpop.f32.mrb[0].mxu0
          %v1774 = vadd.f32 0.0, %v1773
          %v1775 = vpop.f32.mrb[0].mxu0
          %1776 = vmatprep.mubr.f32.mxu0 0.0
          %1777 = vmatmul.mubr.f32.gmra.mrb[0].mxu0 %v1693
          %v1778 = vpop.f32.mrb[0].mxu0
          %v1779 = vadd.f32 0.0, %v1778
          %v1780 = vpop.f32.mrb[0].mxu0
          %1781 = vmatprep.mubr.f32.mxu0 0.0
          %1782 = vmatmul.mubr.f32.gmra.mrb[0].mxu0 %v1695
          %v1783 = vpop.f32.mrb[0].mxu0
          %v1784 = vadd.f32 0.0, %v1783
          %v1785 = vpop.f32.mrb[0].mxu0
          %1786 = vmatprep.mubr.f32.mxu0 0.0
          %1787 = vmatmul.mubr.f32.gmra.mrb[0].mxu0 %v1697
          %v1788 = vpop.f32.mrb[0].mxu0
          %v1789 = vadd.f32 0.0, %v1788
          %v1790 = vpop.f32.mrb[0].mxu0
          %1791 = vmatprep.mubr.f32.mxu0 0.0
          %1792 = vmatmul.mubr.f32.gmra.mrb[0].mxu0 %v1699
          %v1793 = vpop.f32.mrb[0].mxu0
          %v1794 = vadd.f32 0.0, %v1793
          %v1795 = vpop.f32.mrb[0].mxu0
          %1796 = vmatprep.mubr.f32.mxu0 0.0
          %1797 = vmatmul.mubr.f32.gmra.mrb[0].mxu0 %v1701
          %v1798 = vpop.f32.mrb[0].mxu0
          %v1799 = vadd.f32 0.0, %v1798
          %v1800 = vpop.f32.mrb[0].mxu0
          %1801 = vmatprep.mubr.f32.mxu0 0.0
          %1802 = vmatmul.mubr.f32.gmra.mrb[0].mxu0 %v1703
          %v1803 = vpop.f32.mrb[0].mxu0
          %v1804 = vadd.f32 0.0, %v1803
          %v1805 = vpop.f32.mrb[0].mxu0
          %1806 = vmatprep.mubr.f32.mxu0 0.0
          %1807 = vmatmul.mubr.f32.gmra.mrb[0].mxu0 %v1705
          %v1808 = vpop.f32.mrb[0].mxu0
          %v1809 = vadd.f32 0.0, %v1808
          %v1810 = vpop.f32.mrb[0].mxu0
          %1811 = vdwg.mxu0
          %v1812 = vadd.f32 %v1659, %v1774
          %v1813 = vadd.f32 %v1660, %v1779
          %v1814 = vadd.f32 %v1661, %v1784
          %v1815 = vadd.f32 %v1662, %v1789
          %v1816 = vadd.f32 %v1663, %v1794
          %v1817 = vadd.f32 %v1664, %v1799
          %v1818 = vadd.f32 %v1665, %v1804
          %v1819 = vadd.f32 %v1666, %v1809
          %v1820 = vxor.u32 %v1812, 2147483648
          %v1821 = vxor.u32 %v1813, 2147483648
          %v1822 = vxor.u32 %v1814, 2147483648
          %v1823 = vxor.u32 %v1815, 2147483648
          %v1824 = vxor.u32 %v1816, 2147483648
          %v1825 = vxor.u32 %v1817, 2147483648
          %v1826 = vxor.u32 %v1818, 2147483648
          %v1827 = vxor.u32 %v1819, 2147483648
          %v1828 = vmul.f32 %v1820, 1.442695
          %v1829 = vpow.pop %v1828
          %v1830 = vmul.f32 %v1821, 1.442695
          %v1831 = vpow.pop %v1830
          %v1832 = vmul.f32 %v1822, 1.442695
          %v1833 = vpow.pop %v1832
          %v1834 = vmul.f32 %v1823, 1.442695
          %v1835 = vpow.pop %v1834
          %v1836 = vmul.f32 %v1824, 1.442695
          %v1837 = vpow.pop %v1836
          %v1838 = vmul.f32 %v1825, 1.442695
          %v1839 = vpow.pop %v1838
          %v1840 = vmul.f32 %v1826, 1.442695
          %v1841 = vpow.pop %v1840
          %v1842 = vmul.f32 %v1827, 1.442695
          %v1843 = vpow.pop %v1842
          %v1844 = vadd.f32 %v1829, 1.0
          %v1845 = vadd.f32 %v1831, 1.0
          %v1846 = vadd.f32 %v1833, 1.0
          %v1847 = vadd.f32 %v1835, 1.0
          %v1848 = vadd.f32 %v1837, 1.0
          %v1849 = vadd.f32 %v1839, 1.0
          %v1850 = vadd.f32 %v1841, 1.0
          %v1851 = vadd.f32 %v1843, 1.0
          %v1852 = vrcp.pop %v1844
          %v1853 = vmul.f32 1.0, %v1852
          %v1854 = vrcp.pop %v1845
          %v1855 = vmul.f32 1.0, %v1854
          %v1856 = vrcp.pop %v1846
          %v1857 = vmul.f32 1.0, %v1856
          %v1858 = vrcp.pop %v1847
          %v1859 = vmul.f32 1.0, %v1858
          %v1860 = vrcp.pop %v1848
          %v1861 = vmul.f32 1.0, %v1860
          %v1862 = vrcp.pop %v1849
          %v1863 = vmul.f32 1.0, %v1862
          %v1864 = vrcp.pop %v1850
          %v1865 = vmul.f32 1.0, %v1864
          %v1866 = vrcp.pop %v1851
          %v1867 = vmul.f32 1.0, %v1866
          %v1868 = vtanh.pop %v1812
          %v1869 = vtanh.pop %v1813
          %v1870 = vtanh.pop %v1814
          %v1871 = vtanh.pop %v1815
          %v1872 = vtanh.pop %v1816
          %v1873 = vtanh.pop %v1817
          %v1874 = vtanh.pop %v1818
          %v1875 = vtanh.pop %v1819
          %v1876 = vmul.f32 %v1853, %v1601
          %v1877 = vmul.f32 %v1855, %v1602
          %v1878 = vmul.f32 %v1857, %v1603
          %v1879 = vmul.f32 %v1859, %v1604
          %v1880 = vmul.f32 %v1861, %v1605
          %v1881 = vmul.f32 %v1863, %v1606
          %v1882 = vmul.f32 %v1865, %v1607
          %v1883 = vmul.f32 %v1867, %v1608
          %1892 = vrot.lane.b32.xlu0 %v1868, 32
          %v1893 = vpop.permute.xlu0 %1892
          %1894 = vrot.lane.b32.xlu0 %v1869, 32
          %v1895 = vpop.permute.xlu0 %1894
          %1896 = vrot.lane.b32.xlu0 %v1870, 32
          %v1897 = vpop.permute.xlu0 %1896
          %1898 = vrot.lane.b32.xlu0 %v1871, 32
          %v1899 = vpop.permute.xlu0 %1898
          %1900 = vrot.lane.b32.xlu0 %v1872, 32
          %v1901 = vpop.permute.xlu0 %1900
          %1902 = vrot.lane.b32.xlu0 %v1873, 32
          %v1903 = vpop.permute.xlu0 %1902
          %1904 = vrot.lane.b32.xlu0 %v1874, 32
          %v1905 = vpop.permute.xlu0 %1904
          %1906 = vrot.lane.b32.xlu0 %v1875, 32
          %v1907 = vpop.permute.xlu0 %1906
          %v1916 = vmul.f32 %v1853, %v1893
          %v1917 = vmul.f32 %v1855, %v1895
          %v1918 = vmul.f32 %v1857, %v1897
          %v1919 = vmul.f32 %v1859, %v1899
          %v1920 = vmul.f32 %v1861, %v1901
          %v1921 = vmul.f32 %v1863, %v1903
          %v1922 = vmul.f32 %v1865, %v1905
          %v1923 = vmul.f32 %v1867, %v1907
          %1932 = vrot.lane.b32.xlu0 %v1916, 32
          %v1933 = vpop.permute.xlu0 %1932
          %1934 = vrot.lane.b32.xlu0 %v1917, 32
          %v1935 = vpop.permute.xlu0 %1934
          %1936 = vrot.lane.b32.xlu0 %v1918, 32
          %v1937 = vpop.permute.xlu0 %1936
          %1938 = vrot.lane.b32.xlu0 %v1919, 32
          %v1939 = vpop.permute.xlu0 %1938
          %1940 = vrot.lane.b32.xlu0 %v1920, 32
          %v1941 = vpop.permute.xlu0 %1940
          %1942 = vrot.lane.b32.xlu0 %v1921, 32
          %v1943 = vpop.permute.xlu0 %1942
          %1944 = vrot.lane.b32.xlu0 %v1922, 32
          %v1945 = vpop.permute.xlu0 %1944
          %1946 = vrot.lane.b32.xlu0 %v1923, 32
          %v1947 = vpop.permute.xlu0 %1946
          %v1956 = vadd.f32 %v1876, %v1933
          %v1957 = vadd.f32 %v1877, %v1935
          %v1958 = vadd.f32 %v1878, %v1937
          %v1959 = vadd.f32 %v1879, %v1939
          %v1960 = vadd.f32 %v1880, %v1941
          %v1961 = vadd.f32 %v1881, %v1943
          %v1962 = vadd.f32 %v1882, %v1945
          %v1963 = vadd.f32 %v1883, %v1947
          %v1964 = vtanh.pop %v1956
          %v1965 = vtanh.pop %v1957
          %v1966 = vtanh.pop %v1958
          %v1967 = vtanh.pop %v1959
          %v1968 = vtanh.pop %v1960
          %v1969 = vtanh.pop %v1961
          %v1970 = vtanh.pop %v1962
          %v1971 = vtanh.pop %v1963
          %1980 = vrot.lane.b32.xlu0 %v1964, 32
          %v1981 = vpop.permute.xlu0 %1980
          %1982 = vrot.lane.b32.xlu0 %v1965, 32
          %v1983 = vpop.permute.xlu0 %1982
          %1984 = vrot.lane.b32.xlu0 %v1966, 32
          %v1985 = vpop.permute.xlu0 %1984
          %1986 = vrot.lane.b32.xlu0 %v1967, 32
          %v1987 = vpop.permute.xlu0 %1986
          %1988 = vrot.lane.b32.xlu0 %v1968, 32
          %v1989 = vpop.permute.xlu0 %1988
          %1990 = vrot.lane.b32.xlu0 %v1969, 32
          %v1991 = vpop.permute.xlu0 %1990
          %1992 = vrot.lane.b32.xlu0 %v1970, 32
          %v1993 = vpop.permute.xlu0 %1992
          %1994 = vrot.lane.b32.xlu0 %v1971, 32
          %v1995 = vpop.permute.xlu0 %1994
          %v2004 = vmul.f32 %v1853, %v1981
          %v2005 = vmul.f32 %v1855, %v1983
          %v2006 = vmul.f32 %v1857, %v1985
          %v2007 = vmul.f32 %v1859, %v1987
          %v2008 = vmul.f32 %v1861, %v1989
          %v2009 = vmul.f32 %v1863, %v1991
          %v2010 = vmul.f32 %v1865, %v1993
          %v2011 = vmul.f32 %v1867, %v1995
          %v2013 = vlaneseq
          %v2014 = vshrl.u32 %v2013, 7
          %v2015 = vsub.s32 0, %v2014
          %v2016 = vrot.slane %v266, %v2015
          %2026 = vrot.lane.b32.xlu0 %v2004, 64
          %v2027 = vpop.permute.xlu0 %2026
          %2028 = vrot.lane.b32.xlu0 %v2005, 64
          %v2029 = vpop.permute.xlu0 %2028
          %2030 = vrot.lane.b32.xlu0 %v2006, 64
          %v2031 = vpop.permute.xlu0 %2030
          %2032 = vrot.lane.b32.xlu0 %v2007, 64
          %v2033 = vpop.permute.xlu0 %2032
          %2034 = vrot.lane.b32.xlu0 %v2008, 64
          %v2035 = vpop.permute.xlu0 %2034
          %2036 = vrot.lane.b32.xlu0 %v2009, 64
          %v2037 = vpop.permute.xlu0 %2036
          %2038 = vrot.lane.b32.xlu0 %v2010, 64
          %v2039 = vpop.permute.xlu0 %2038
          %2040 = vrot.lane.b32.xlu0 %v2011, 64
          %v2041 = vpop.permute.xlu0 %2040
          %v2042 = vsel %vm283, %v2027, 0
          %v2044 = vsel %vm283, %v2029, 0
          %v2046 = vsel %vm283, %v2031, 0
          %v2048 = vsel %vm283, %v2033, 0
          %v2050 = vsel %vm283, %v2035, 0
          %v2052 = vsel %vm283, %v2037, 0
          %v2054 = vsel %vm283, %v2039, 0
          %v2056 = vsel %vm283, %v2041, 0
          %2058 = vmatprep.subr.mxu0 0.0
          %2059 = vmatpush1.msra.mxu0 %v262
          %2060 = vmatprep.subr.mxu0 0.0
          %2061 = vmatpush1.msra.mxu0 %v263
          %2062 = vmatprep.subr.mxu0 0.0
          %2063 = vmatpush1.msra.mxu0 %v264
          %2064 = vmatprep.subr.mxu0 0.0
          %2065 = vmatpush1.msra.mxu0 %v265
          %2066 = vmatprep.subr.mxu0 0.0
          %2067 = vmatpush1.msra.mxu0 0.0
          %2068 = vmatprep.subr.mxu0 0.0
          %2069 = vmatpush1.msra.mxu0 0.0
          %2070 = vmatprep.subr.mxu0 0.0
          %2071 = vmatpush1.msra.mxu0 0.0
          %2072 = vmatprep.subr.mxu0 0.0
          %2073 = vmatpush1.msra.mxu0 0.0
          %2074 = vmatprep.subr.mxu0 0.0
          %2075 = vmatpush1.msra.mxu0 0.0
          %2076 = vmatprep.subr.mxu0 0.0
          %2077 = vmatpush1.msra.mxu0 0.0
          %2078 = vmatprep.subr.mxu0 0.0
          %2079 = vmatpush1.msra.mxu0 0.0
          %2080 = vmatprep.subr.mxu0 0.0
          %2081 = vmatpush1.msra.mxu0 0.0
          %2082 = vmatprep.subr.mxu0 0.0
          %2083 = vmatpush1.msra.mxu0 0.0
          %2084 = vmatprep.subr.mxu0 0.0
          %2085 = vmatpush1.msra.mxu0 0.0
          %2086 = vmatprep.subr.mxu0 0.0
          %2087 = vmatpush1.msra.mxu0 0.0
          %2088 = vmatprep.subr.mxu0 0.0
          %2089 = vmatpush1.msra.mxu0 0.0
          %2090 = vmatprep.subr.mxu0 0.0
          %2091 = vmatpush1.msra.mxu0 0.0
          %2092 = vmatprep.subr.mxu0 0.0
          %2093 = vmatpush1.msra.mxu0 0.0
          %2094 = vmatprep.subr.mxu0 0.0
          %2095 = vmatpush1.msra.mxu0 0.0
          %2096 = vmatprep.subr.mxu0 0.0
          %2097 = vmatpush1.msra.mxu0 0.0
          %2098 = vmatprep.subr.mxu0 0.0
          %2099 = vmatpush1.msra.mxu0 0.0
          %2100 = vmatprep.subr.mxu0 0.0
          %2101 = vmatpush1.msra.mxu0 0.0
          %2102 = vmatprep.subr.mxu0 0.0
          %2103 = vmatpush1.msra.mxu0 0.0
          %2104 = vmatprep.subr.mxu0 0.0
          %2105 = vmatpush1.msra.mxu0 0.0
          %2106 = vmatprep.subr.mxu0 0.0
          %2107 = vmatpush1.msra.mxu0 0.0
          %2108 = vmatprep.subr.mxu0 0.0
          %2109 = vmatpush1.msra.mxu0 0.0
          %2110 = vmatprep.subr.mxu0 0.0
          %2111 = vmatpush1.msra.mxu0 0.0
          %2112 = vmatprep.subr.mxu0 0.0
          %2113 = vmatpush1.msra.mxu0 0.0
          %2114 = vmatprep.subr.mxu0 0.0
          %2115 = vmatpush1.msra.mxu0 0.0
          %2116 = vmatprep.subr.mxu0 0.0
          %2117 = vmatpush1.msra.mxu0 0.0
          %2118 = vmatprep.subr.mxu0 0.0
          %2119 = vmatpush1.msra.mxu0 0.0
          %2120 = vmatprep.subr.mxu0 0.0
          %2121 = vmatpush1.msra.mxu0 0.0
          %2122 = vmatprep.mubr.f32.mxu0 0.0
          %2123 = vmatmul.mubr.f32.gmra.mrb[0].mxu0 %v2042
          %v2124 = vpop.f32.mrb[0].mxu0
          %v2125 = vadd.f32 %v2016, %v2124
          %v2126 = vpop.f32.mrb[0].mxu0
          %2127 = vmatprep.mubr.f32.mxu0 0.0
          %2128 = vmatmul.mubr.f32.gmra.mrb[0].mxu0 %v2044
          %v2129 = vpop.f32.mrb[0].mxu0
          %v2130 = vadd.f32 %v2016, %v2129
          %v2131 = vpop.f32.mrb[0].mxu0
          %2132 = vmatprep.mubr.f32.mxu0 0.0
          %2133 = vmatmul.mubr.f32.gmra.mrb[0].mxu0 %v2046
          %v2134 = vpop.f32.mrb[0].mxu0
          %v2135 = vadd.f32 %v2016, %v2134
          %v2136 = vpop.f32.mrb[0].mxu0
          %2137 = vmatprep.mubr.f32.mxu0 0.0
          %2138 = vmatmul.mubr.f32.gmra.mrb[0].mxu0 %v2048
          %v2139 = vpop.f32.mrb[0].mxu0
          %v2140 = vadd.f32 %v2016, %v2139
          %v2141 = vpop.f32.mrb[0].mxu0
          %2142 = vmatprep.mubr.f32.mxu0 0.0
          %2143 = vmatmul.mubr.f32.gmra.mrb[0].mxu0 %v2050
          %v2144 = vpop.f32.mrb[0].mxu0
          %v2145 = vadd.f32 %v2016, %v2144
          %v2146 = vpop.f32.mrb[0].mxu0
          %2147 = vmatprep.mubr.f32.mxu0 0.0
          %2148 = vmatmul.mubr.f32.gmra.mrb[0].mxu0 %v2052
          %v2149 = vpop.f32.mrb[0].mxu0
          %v2150 = vadd.f32 %v2016, %v2149
          %v2151 = vpop.f32.mrb[0].mxu0
          %2152 = vmatprep.mubr.f32.mxu0 0.0
          %2153 = vmatmul.mubr.f32.gmra.mrb[0].mxu0 %v2054
          %v2154 = vpop.f32.mrb[0].mxu0
          %v2155 = vadd.f32 %v2016, %v2154
          %v2156 = vpop.f32.mrb[0].mxu0
          %2157 = vmatprep.mubr.f32.mxu0 0.0
          %2158 = vmatmul.mubr.f32.gmra.mrb[0].mxu0 %v2056
          %v2159 = vpop.f32.mrb[0].mxu0
          %v2160 = vadd.f32 %v2016, %v2159
          %v2161 = vpop.f32.mrb[0].mxu0
          %2162 = vdwg.mxu0
          %2163 = vmax.xlane.f32.xlu0 %v2125
          %v2164 = vpop.xlane.xlu0 %2163
          %2165 = vmax.xlane.f32.xlu0 %v2130
          %v2166 = vpop.xlane.xlu0 %2165
          %2167 = vmax.xlane.f32.xlu0 %v2135
          %v2168 = vpop.xlane.xlu0 %2167
          %2169 = vmax.xlane.f32.xlu0 %v2140
          %v2170 = vpop.xlane.xlu0 %2169
          %2171 = vmax.xlane.f32.xlu0 %v2145
          %v2172 = vpop.xlane.xlu0 %2171
          %2173 = vmax.xlane.f32.xlu0 %v2150
          %v2174 = vpop.xlane.xlu0 %2173
          %2175 = vmax.xlane.f32.xlu0 %v2155
          %v2176 = vpop.xlane.xlu0 %2175
          %2177 = vmax.xlane.f32.xlu0 %v2160
          %v2178 = vpop.xlane.xlu0 %2177
          %v2179 = vsub.f32 %v2125, %v2164
          %v2180 = vsub.f32 %v2130, %v2166
          %v2181 = vsub.f32 %v2135, %v2168
          %v2182 = vsub.f32 %v2140, %v2170
          %v2183 = vsub.f32 %v2145, %v2172
          %v2184 = vsub.f32 %v2150, %v2174
          %v2185 = vsub.f32 %v2155, %v2176
          %v2186 = vsub.f32 %v2160, %v2178
          %v2187 = vmul.f32 %v2179, 1.442695
          %v2188 = vpow.pop %v2187
          %v2189 = vmul.f32 %v2180, 1.442695
          %v2190 = vpow.pop %v2189
          %v2191 = vmul.f32 %v2181, 1.442695
          %v2192 = vpow.pop %v2191
          %v2193 = vmul.f32 %v2182, 1.442695
          %v2194 = vpow.pop %v2193
          %v2195 = vmul.f32 %v2183, 1.442695
          %v2196 = vpow.pop %v2195
          %v2197 = vmul.f32 %v2184, 1.442695
          %v2198 = vpow.pop %v2197
          %v2199 = vmul.f32 %v2185, 1.442695
          %v2200 = vpow.pop %v2199
          %v2201 = vmul.f32 %v2186, 1.442695
          %v2202 = vpow.pop %v2201
          %2203 = vadd.xlane.f32.xlu0 %v2188
          %v2204 = vpop.xlane.xlu0 %2203
          %2205 = vadd.xlane.f32.xlu0 %v2190
          %v2206 = vpop.xlane.xlu0 %2205
          %2207 = vadd.xlane.f32.xlu0 %v2192
          %v2208 = vpop.xlane.xlu0 %2207
          %2209 = vadd.xlane.f32.xlu0 %v2194
          %v2210 = vpop.xlane.xlu0 %2209
          %2211 = vadd.xlane.f32.xlu0 %v2196
          %v2212 = vpop.xlane.xlu0 %2211
          %2213 = vadd.xlane.f32.xlu0 %v2198
          %v2214 = vpop.xlane.xlu0 %2213
          %2215 = vadd.xlane.f32.xlu0 %v2200
          %v2216 = vpop.xlane.xlu0 %2215
          %2217 = vadd.xlane.f32.xlu0 %v2202
          %v2218 = vpop.xlane.xlu0 %2217
          %v2219 = vlog2.pop %v2204
          %v2220 = vmul.f32 %v2219, 0.6931472
          %v2221 = vlog2.pop %v2206
          %v2222 = vmul.f32 %v2221, 0.6931472
          %v2223 = vlog2.pop %v2208
          %v2224 = vmul.f32 %v2223, 0.6931472
          %v2225 = vlog2.pop %v2210
          %v2226 = vmul.f32 %v2225, 0.6931472
          %v2227 = vlog2.pop %v2212
          %v2228 = vmul.f32 %v2227, 0.6931472
          %v2229 = vlog2.pop %v2214
          %v2230 = vmul.f32 %v2229, 0.6931472
          %v2231 = vlog2.pop %v2216
          %v2232 = vmul.f32 %v2231, 0.6931472
          %v2233 = vlog2.pop %v2218
          %v2234 = vmul.f32 %v2233, 0.6931472
          %v2235 = vsub.f32 %v2179, %v2220
          %v2236 = vsub.f32 %v2180, %v2222
          %v2237 = vsub.f32 %v2181, %v2224
          %v2238 = vsub.f32 %v2182, %v2226
          %v2239 = vsub.f32 %v2183, %v2228
          %v2240 = vsub.f32 %v2184, %v2230
          %v2241 = vsub.f32 %v2185, %v2232
          %v2242 = vsub.f32 %v2186, %v2234
          %s2243 = scalar_lea.vmem %s257, %s273 [#allocation10]
          %2244 = vst [vmem:[%s2243] sm:$0xff] %v2235
          %2245 = vst [vmem:[%s2243 + $0x8] sm:$0xff] %v2236
          %2246 = vst [vmem:[%s2243 + $0x10] sm:$0xff] %v2237
          %2247 = vst [vmem:[%s2243 + $0x18] sm:$0xff] %v2238
          %2248 = vst [vmem:[%s2243 + $0x20] sm:$0xff] %v2239
          %2249 = vst [vmem:[%s2243 + $0x28] sm:$0xff] %v2240
          %2250 = vst [vmem:[%s2243 + $0x30] sm:$0xff] %v2241
          %2251 = vst [vmem:[%s2243 + $0x38] sm:$0xff] %v2242
        $region57: #{tpu_custom_call.1} parent=35 // loop_footer
          %s272 = sadd.s32 1, %s268
        $region58: #{tpu_custom_call.1} parent=35 // loop_footer_branch
          %267 = sbr.rel target = $region54
        $region59: #{tpu_custom_call.1} parent=35 // loop_exit
          _
        %s2252 = sand.u32 %s120, 1
        %s2253 = scalar_lea.sflag [#allocation4], %s2252
        %s2254 = sand.u32 %s120, 1
        %s2255 = smul.addr %s2254, 320
        %s2256 = scalar_lea.vmem [#allocation10], %s2255
        // Predicated region
        $region60: #{tpu_custom_call.1} parent=35 // pred_check
          %p2257 = pneg %p130
        $region61: #{tpu_custom_call.1} parent=35 // pred_check_branch
          %2259 = sbr.rel (%p2257) target = $region63
        $region62: #{tpu_custom_call.1} parent=35 // pred_region
          %s2261 = ssub.s32 5120, 5120
          %2262 = vsyncadd %s2253, %s2261
          %s2263 = smul.addr %s23, 40
          %s2264 = smul.addr %s2263, 128
          %s2265 = scalar_lea.hbm %s4, %s2264
          %s2266 = sshll.u32 %s2256, 4
          %s2267 = int_to_ptr.vmem [resolvable:$true] %s2266
          %2272 = dma.vmem_to_hbm [thread:$0]  %s2267, 5120, %s2265, %s2253, 128, 128, 8
        $region63: #{tpu_custom_call.1} parent=35 // pred_fallthru
          _
      $region36: #{tpu_custom_call.1} parent=5 // pred_fallthru
        _
      %p2273 = scmp.le.s32.totalorder 2, %s18
      // Predicated region
      $region64: #{tpu_custom_call.1} parent=5 // pred_check
        %p2274 = pneg %p2273
      $region65: #{tpu_custom_call.1} parent=5 // pred_check_branch
        %2276 = sbr.rel (%p2274) target = $region67
      $region66: #{tpu_custom_call.1} parent=5 // pred_region
        %s2277 = ssub.s32 %s18, 2
        // Predicated region
        $region68: #{tpu_custom_call.1} parent=66 // pred_check
          %p2278 = pneg %p136
        $region69: #{tpu_custom_call.1} parent=66 // pred_check_branch
          %2280 = sbr.rel (%p2278) target = $region71
        $region70: #{tpu_custom_call.1} parent=66 // pred_region
          %s2281 = sand.u32 %s121, 1
          %s2282 = scalar_lea.sflag [#allocation4], %s2281
          %s2283 = sand.u32 %s121, 1
          %s2284 = smul.addr %s2283, 320
          %s2285 = scalar_lea.vmem [#allocation10], %s2284
          %2286 = dma.done %s2282, 5120
        $region71: #{tpu_custom_call.1} parent=66 // pred_fallthru
          _
      $region67: #{tpu_custom_call.1} parent=5 // pred_fallthru
        _
    $region6: #{tpu_custom_call.1} parent=1 // loop_footer
      %s22 = sadd.s32 1, %s18
    $region7: #{tpu_custom_call.1} parent=1 // loop_footer_branch
      %17 = sbr.rel target = $region3
    $region8: #{tpu_custom_call.1} parent=1 // loop_exit
      _
    %2287 = vsyncpa [#allocation3], 1
    %s2288 = scalar_lea.sflag [#allocation3], 1
    %2289 = vsyncpa %s2288, 1
    %2290 = vsyncpa [#allocation6], 1
    %2291 = vsyncpa [#allocation9], 1
    %2292 = vsyncpa [#allocation4], 1
    %s2293 = scalar_lea.sflag [#allocation4], 1
    %2294 = vsyncpa %s2293, 1

</llo_original>
